<compile_context>
chip_gen: v5e
topology: v5e:2x2
jax: 0.10.0
libtpu: 0.0.40
codegen_flags: <defaults>
</compile_context>

<pallas_src>
import functools

import jax
import jax.numpy as jnp
from jax.experimental import pallas as pl
from jax.experimental.pallas import tpu as pltpu


def gru_decode_kernel(x_ref, h0_ref,
                      wih_r_ref, wih_z_ref, wih_n_ref,
                      bih_r_ref, bih_z_ref, bih_n_ref,
                      whh_r_ref, whh_z_ref, whh_n_ref,
                      bhh_r_ref, bhh_z_ref, bhh_n_ref,
                      wmap_ref, bmap_ref,
                      out_ref, h_all_ref, *, T, B):
    """Whole decode in one invocation.

    x_ref    : (T*B, 2r) bf16  time-major teacher-forced inputs (a_emb ++ w_emb)
    h0_ref   : (B, H)    f32   initial hidden state
    wih_*    : (2r, H)   bf16  per-gate input weights (PyTorch order r, z, n)
    bih_*    : (1, H)    f32
    whh_*    : (H, H)    f32   per-gate hidden weights (kept f32 on serial path)
    bhh_*    : (1, H)    f32
    wmap_ref : (H, nw)   bf16  mapper weight (transposed)
    bmap_ref : (1, nw)   f32
    out_ref  : (T*B, nw) f32   log_softmax outputs, time-major flattened
    h_all_ref: (T*B, H)  f32   VMEM scratch collecting h_t for the batched mapper
    """
    # --- Batched input projection: one MXU call per gate over all timesteps. ---
    x = x_ref[...]                                                    # (T*B, 2r)
    gi_r = jnp.dot(x, wih_r_ref[...], preferred_element_type=jnp.float32) + bih_r_ref[...]
    gi_z = jnp.dot(x, wih_z_ref[...], preferred_element_type=jnp.float32) + bih_z_ref[...]
    gi_n = jnp.dot(x, wih_n_ref[...], preferred_element_type=jnp.float32) + bih_n_ref[...]

    whh_r = whh_r_ref[...]
    whh_z = whh_z_ref[...]
    whh_n = whh_n_ref[...]
    bhh_r = bhh_r_ref[...]
    bhh_z = bhh_z_ref[...]
    bhh_n = bhh_n_ref[...]

    h = h0_ref[...]                                                   # (B, H) f32

    # --- Serial recurrence, fully unrolled at trace time (T is tiny, static). ---
    # PyTorch GRU: r/z gates, n = tanh(gi_n + r * (W_hn h + b_hn)),
    #              h' = (1 - z) * n + z * h
    for t in range(T):
        lo = t * B
        gh_r = jnp.dot(h, whh_r, preferred_element_type=jnp.float32) + bhh_r
        gh_z = jnp.dot(h, whh_z, preferred_element_type=jnp.float32) + bhh_z
        gh_n = jnp.dot(h, whh_n, preferred_element_type=jnp.float32) + bhh_n
        r = jax.nn.sigmoid(gi_r[lo:lo + B, :] + gh_r)
        z = jax.nn.sigmoid(gi_z[lo:lo + B, :] + gh_z)
        n = jnp.tanh(gi_n[lo:lo + B, :] + r * gh_n)
        h = (1.0 - z) * n + z * h
        h_all_ref[lo:lo + B, :] = h                                   # static sublane slice

    # --- Batched mapper + log_softmax over all T*B rows (lane-dense nw). ---
    h_all = h_all_ref[...].astype(wmap_ref.dtype)                     # (T*B, H)
    dec = jnp.dot(h_all, wmap_ref[...], preferred_element_type=jnp.float32) + bmap_ref[...]
    m = jnp.max(dec, axis=-1, keepdims=True)
    lse = jnp.log(jnp.sum(jnp.exp(dec - m), axis=-1, keepdims=True)) + m
    out_ref[...] = dec - lse


def pyfred_forward(a, src, trg, hidden, params):
    """Replicates pyfred.forward with teacher_forcing_ratio=1.0, eval dropout."""
    W_emb = params["W"]          # (nw, r)  frozen word embeddings
    A_emb = params["A"]          # (na, r)  author/action embeddings
    wih = params["wih"]          # (2r, 3H) PyTorch weight_ih_l0, transposed
    bih = params["bih"]          # (1, 3H)
    whh = params["whh"]          # (H, 3H)  PyTorch weight_hh_l0, transposed
    bhh = params["bhh"]          # (1, 3H)
    wmap = params["wmap"]        # (H, nw)
    bmap = params["bmap"]        # (1, nw)

    B = a.shape[0]
    T = trg.shape[1]
    r = W_emb.shape[1]
    H = whh.shape[0]
    nw = wmap.shape[1]

    # Glue: embedding gathers + teacher-forced input construction (time-major).
    a_emb = A_emb[a]                                               # (B, r)
    tokens = jnp.concatenate([src[:, 0:1], trg[:, :T - 1]], 1)     # (B, T)
    w_emb = W_emb[tokens]                                          # (B, T, r)
    a_rep = jnp.broadcast_to(a_emb[:, None, :], (B, T, r))
    x_seq = jnp.concatenate([a_rep, w_emb], axis=-1)               # (B, T, 2r)
    x_flat = jnp.transpose(x_seq, (1, 0, 2)).reshape(T * B, 2 * r)  # time-major, flattened

    # Per-gate split (PyTorch gate order r, z, n) -> no lane-offset slicing in-kernel.
    wih_r, wih_z, wih_n = wih[:, :H], wih[:, H:2 * H], wih[:, 2 * H:]
    whh_r, whh_z, whh_n = whh[:, :H], whh[:, H:2 * H], whh[:, 2 * H:]
    bih_r, bih_z, bih_n = bih[:, :H], bih[:, H:2 * H], bih[:, 2 * H:]
    bhh_r, bhh_z, bhh_n = bhh[:, :H], bhh[:, H:2 * H], bhh[:, 2 * H:]

    # bf16 on the MXU-facing batched matmuls (f32 accumulation in-kernel);
    # serial recurrence stays f32 (no per-step casts, v5e-friendly).
    bf = jnp.bfloat16
    f32 = jnp.float32

    kernel = functools.partial(gru_decode_kernel, T=T, B=B)
    out_flat = pl.pallas_call(
        kernel,
        out_shape=jax.ShapeDtypeStruct((T * B, nw), f32),
        scratch_shapes=[pltpu.VMEM((T * B, H), f32)],
    )(
        x_flat.astype(bf), hidden.astype(f32),
        wih_r.astype(bf), wih_z.astype(bf), wih_n.astype(bf),
        bih_r.astype(f32), bih_z.astype(f32), bih_n.astype(f32),
        whh_r.astype(f32), whh_z.astype(f32), whh_n.astype(f32),
        bhh_r.astype(f32), bhh_z.astype(f32), bhh_n.astype(f32),
        wmap.astype(bf), bmap.astype(f32),
    )

    # Back to PyTorch layout: (B, T, nw)
    return jnp.transpose(out_flat.reshape(T, B, nw), (1, 0, 2))


def make_params(key, nw, r, na, nhid):
    ks = jax.random.split(key, 8)
    s = 0.1
    return {
        "W": s * jax.random.normal(ks[0], (nw, r), jnp.float32),
        "A": s * jax.random.normal(ks[1], (na, r), jnp.float32),
        "wih": s * jax.random.normal(ks[2], (2 * r, 3 * nhid), jnp.float32),
        "bih": s * jax.random.normal(ks[3], (1, 3 * nhid), jnp.float32),
        "whh": s * jax.random.normal(ks[4], (nhid, 3 * nhid), jnp.float32),
        "bhh": s * jax.random.normal(ks[5], (1, 3 * nhid), jnp.float32),
        "wmap": s * jax.random.normal(ks[6], (nhid, nw), jnp.float32),
        "bmap": s * jax.random.normal(ks[7], (1, nw), jnp.float32),
    }


if __name__ == "__main__":
    # Small shapes consistent with the module.
    batch, trg_len, src_len = 8, 6, 6
    nw, r, na, nhid = 256, 16, 5, 32

    key = jax.random.PRNGKey(0)
    kp, ka, ks, kt, kh = jax.random.split(key, 5)

    params = make_params(kp, nw, r, na, nhid)
    a = jax.random.randint(ka, (batch,), 0, na, dtype=jnp.int32)
    src = jax.random.randint(ks, (batch, src_len), 0, nw, dtype=jnp.int32)
    trg = jax.random.randint(kt, (batch, trg_len), 0, nw, dtype=jnp.int32)
    hidden = jax.random.normal(kh, (batch, nhid), jnp.float32)

    out = pyfred_forward(a, src, trg, hidden, params)
    out = jax.block_until_ready(out)
    assert out.shape == (batch, trg_len, nw)
    # log_softmax rows should sum to ~1 in prob space
    assert bool(jnp.allclose(jnp.sum(jnp.exp(out), axis=-1), 1.0, atol=1e-3))
    print("KERNEL_OK")
</pallas_src>

<mosaic_0001>
module attributes {stable_mosaic.version = 11 : i64} {
  func.func @gru_decode_kernel(%arg0: memref<48x32xbf16, #tpu.memory_space<vmem>>, %arg1: memref<8x32xf32, #tpu.memory_space<vmem>>, %arg2: memref<32x32xbf16, #tpu.memory_space<vmem>>, %arg3: memref<32x32xbf16, #tpu.memory_space<vmem>>, %arg4: memref<32x32xbf16, #tpu.memory_space<vmem>>, %arg5: memref<1x32xf32, #tpu.memory_space<vmem>>, %arg6: memref<1x32xf32, #tpu.memory_space<vmem>>, %arg7: memref<1x32xf32, #tpu.memory_space<vmem>>, %arg8: memref<32x32xf32, #tpu.memory_space<vmem>>, %arg9: memref<32x32xf32, #tpu.memory_space<vmem>>, %arg10: memref<32x32xf32, #tpu.memory_space<vmem>>, %arg11: memref<1x32xf32, #tpu.memory_space<vmem>>, %arg12: memref<1x32xf32, #tpu.memory_space<vmem>>, %arg13: memref<1x32xf32, #tpu.memory_space<vmem>>, %arg14: memref<32x256xbf16, #tpu.memory_space<vmem>>, %arg15: memref<1x256xf32, #tpu.memory_space<vmem>>, %arg16: memref<48x256xf32, #tpu.memory_space<vmem>>, %arg17: memref<48x32xf32, #tpu.memory_space<vmem>>) attributes {dimension_semantics = [], scalar_prefetch = 0 : i64, scratch_operands = 1 : i64, tpu.core_type = #tpu.core_type<tc>} {
    %c0 = arith.constant 0 : index
    %c0_0 = arith.constant 0 : index
    %0 = vector.load %arg0[%c0, %c0_0] : memref<48x32xbf16, #tpu.memory_space<vmem>>, vector<48x32xbf16>
    %c0_1 = arith.constant 0 : index
    %c0_2 = arith.constant 0 : index
    %1 = vector.load %arg2[%c0_1, %c0_2] : memref<32x32xbf16, #tpu.memory_space<vmem>>, vector<32x32xbf16>
    %cst = arith.constant dense<0.000000e+00> : vector<48x32xf32>
    %2 = tpu.matmul %0, %1, %cst {dimension_numbers = #tpu.dot_dimension_numbers<[1], [0], [0], [1], [0, 0, 1, 1], [], []>} : vector<48x32xbf16>, vector<32x32xbf16>, vector<48x32xf32> -> vector<48x32xf32>
    %c0_3 = arith.constant 0 : index
    %c0_4 = arith.constant 0 : index
    %3 = vector.load %arg5[%c0_3, %c0_4] : memref<1x32xf32, #tpu.memory_space<vmem>>, vector<1x32xf32>
    %4 = vector.broadcast %3 : vector<1x32xf32> to vector<48x32xf32>
    %5 = arith.addf %2, %4 : vector<48x32xf32>
    %c0_5 = arith.constant 0 : index
    %c0_6 = arith.constant 0 : index
    %6 = vector.load %arg3[%c0_5, %c0_6] : memref<32x32xbf16, #tpu.memory_space<vmem>>, vector<32x32xbf16>
    %cst_7 = arith.constant dense<0.000000e+00> : vector<48x32xf32>
    %7 = tpu.matmul %0, %6, %cst_7 {dimension_numbers = #tpu.dot_dimension_numbers<[1], [0], [0], [1], [0, 0, 1, 1], [], []>} : vector<48x32xbf16>, vector<32x32xbf16>, vector<48x32xf32> -> vector<48x32xf32>
    %c0_8 = arith.constant 0 : index
    %c0_9 = arith.constant 0 : index
    %8 = vector.load %arg6[%c0_8, %c0_9] : memref<1x32xf32, #tpu.memory_space<vmem>>, vector<1x32xf32>
    %9 = vector.broadcast %8 : vector<1x32xf32> to vector<48x32xf32>
    %10 = arith.addf %7, %9 : vector<48x32xf32>
    %c0_10 = arith.constant 0 : index
    %c0_11 = arith.constant 0 : index
    %11 = vector.load %arg4[%c0_10, %c0_11] : memref<32x32xbf16, #tpu.memory_space<vmem>>, vector<32x32xbf16>
    %cst_12 = arith.constant dense<0.000000e+00> : vector<48x32xf32>
    %12 = tpu.matmul %0, %11, %cst_12 {dimension_numbers = #tpu.dot_dimension_numbers<[1], [0], [0], [1], [0, 0, 1, 1], [], []>} : vector<48x32xbf16>, vector<32x32xbf16>, vector<48x32xf32> -> vector<48x32xf32>
    %c0_13 = arith.constant 0 : index
    %c0_14 = arith.constant 0 : index
    %13 = vector.load %arg7[%c0_13, %c0_14] : memref<1x32xf32, #tpu.memory_space<vmem>>, vector<1x32xf32>
    %14 = vector.broadcast %13 : vector<1x32xf32> to vector<48x32xf32>
    %15 = arith.addf %12, %14 : vector<48x32xf32>
    %c0_15 = arith.constant 0 : index
    %c0_16 = arith.constant 0 : index
    %16 = vector.load %arg8[%c0_15, %c0_16] : memref<32x32xf32, #tpu.memory_space<vmem>>, vector<32x32xf32>
    %c0_17 = arith.constant 0 : index
    %c0_18 = arith.constant 0 : index
    %17 = vector.load %arg9[%c0_17, %c0_18] : memref<32x32xf32, #tpu.memory_space<vmem>>, vector<32x32xf32>
    %c0_19 = arith.constant 0 : index
    %c0_20 = arith.constant 0 : index
    %18 = vector.load %arg10[%c0_19, %c0_20] : memref<32x32xf32, #tpu.memory_space<vmem>>, vector<32x32xf32>
    %c0_21 = arith.constant 0 : index
    %c0_22 = arith.constant 0 : index
    %19 = vector.load %arg11[%c0_21, %c0_22] : memref<1x32xf32, #tpu.memory_space<vmem>>, vector<1x32xf32>
    %c0_23 = arith.constant 0 : index
    %c0_24 = arith.constant 0 : index
    %20 = vector.load %arg12[%c0_23, %c0_24] : memref<1x32xf32, #tpu.memory_space<vmem>>, vector<1x32xf32>
    %c0_25 = arith.constant 0 : index
    %c0_26 = arith.constant 0 : index
    %21 = vector.load %arg13[%c0_25, %c0_26] : memref<1x32xf32, #tpu.memory_space<vmem>>, vector<1x32xf32>
    %c0_27 = arith.constant 0 : index
    %c0_28 = arith.constant 0 : index
    %22 = vector.load %arg1[%c0_27, %c0_28] : memref<8x32xf32, #tpu.memory_space<vmem>>, vector<8x32xf32>
    %cst_29 = arith.constant dense<0.000000e+00> : vector<8x32xf32>
    %23 = tpu.matmul %22, %16, %cst_29 {dimension_numbers = #tpu.dot_dimension_numbers<[1], [0], [0], [1], [0, 0, 1, 1], [], []>} : vector<8x32xf32>, vector<32x32xf32>, vector<8x32xf32> -> vector<8x32xf32>
    %24 = vector.broadcast %19 : vector<1x32xf32> to vector<8x32xf32>
    %25 = arith.addf %23, %24 : vector<8x32xf32>
    %cst_30 = arith.constant dense<0.000000e+00> : vector<8x32xf32>
    %26 = tpu.matmul %22, %17, %cst_30 {dimension_numbers = #tpu.dot_dimension_numbers<[1], [0], [0], [1], [0, 0, 1, 1], [], []>} : vector<8x32xf32>, vector<32x32xf32>, vector<8x32xf32> -> vector<8x32xf32>
    %27 = vector.broadcast %20 : vector<1x32xf32> to vector<8x32xf32>
    %28 = arith.addf %26, %27 : vector<8x32xf32>
    %cst_31 = arith.constant dense<0.000000e+00> : vector<8x32xf32>
    %29 = tpu.matmul %22, %18, %cst_31 {dimension_numbers = #tpu.dot_dimension_numbers<[1], [0], [0], [1], [0, 0, 1, 1], [], []>} : vector<8x32xf32>, vector<32x32xf32>, vector<8x32xf32> -> vector<8x32xf32>
    %30 = vector.broadcast %21 : vector<1x32xf32> to vector<8x32xf32>
    %31 = arith.addf %29, %30 : vector<8x32xf32>
    %32 = vector.extract_strided_slice %5 {offsets = [0, 0], sizes = [8, 32], strides = [1, 1]} : vector<48x32xf32> to vector<8x32xf32>
    %33 = arith.addf %32, %25 : vector<8x32xf32>
    %34 = arith.negf %33 : vector<8x32xf32>
    %35 = math.exp %34 : vector<8x32xf32>
    %cst_32 = arith.constant 1.000000e+00 : f32
    %36 = vector.broadcast %cst_32 : f32 to vector<8x32xf32>
    %37 = arith.addf %36, %35 : vector<8x32xf32>
    %38 = arith.divf %36, %37 : vector<8x32xf32>
    %39 = vector.extract_strided_slice %10 {offsets = [0, 0], sizes = [8, 32], strides = [1, 1]} : vector<48x32xf32> to vector<8x32xf32>
    %40 = arith.addf %39, %28 : vector<8x32xf32>
    %41 = arith.negf %40 : vector<8x32xf32>
    %42 = math.exp %41 : vector<8x32xf32>
    %cst_33 = arith.constant 1.000000e+00 : f32
    %43 = vector.broadcast %cst_33 : f32 to vector<8x32xf32>
    %44 = arith.addf %43, %42 : vector<8x32xf32>
    %45 = arith.divf %43, %44 : vector<8x32xf32>
    %46 = vector.extract_strided_slice %15 {offsets = [0, 0], sizes = [8, 32], strides = [1, 1]} : vector<48x32xf32> to vector<8x32xf32>
    %47 = arith.mulf %38, %31 : vector<8x32xf32>
    %48 = arith.addf %46, %47 : vector<8x32xf32>
    %49 = math.tanh %48 : vector<8x32xf32>
    %cst_34 = arith.constant 1.000000e+00 : f32
    %50 = vector.broadcast %cst_34 : f32 to vector<8x32xf32>
    %51 = arith.subf %50, %45 : vector<8x32xf32>
    %52 = arith.mulf %51, %49 : vector<8x32xf32>
    %53 = arith.mulf %45, %22 : vector<8x32xf32>
    %54 = arith.addf %52, %53 : vector<8x32xf32>
    %c0_35 = arith.constant 0 : index
    %c0_36 = arith.constant 0 : index
    %55 = vector.load %arg17[%c0_35, %c0_36] : memref<48x32xf32, #tpu.memory_space<vmem>>, vector<8x32xf32>
    tpu.vector_store %arg17[%c0_35, %c0_36], %54 {strides = array<i32>} : memref<48x32xf32, #tpu.memory_space<vmem>>, vector<8x32xf32>,
    %cst_37 = arith.constant dense<0.000000e+00> : vector<8x32xf32>
    %56 = tpu.matmul %54, %16, %cst_37 {dimension_numbers = #tpu.dot_dimension_numbers<[1], [0], [0], [1], [0, 0, 1, 1], [], []>} : vector<8x32xf32>, vector<32x32xf32>, vector<8x32xf32> -> vector<8x32xf32>
    %57 = vector.broadcast %19 : vector<1x32xf32> to vector<8x32xf32>
    %58 = arith.addf %56, %57 : vector<8x32xf32>
    %cst_38 = arith.constant dense<0.000000e+00> : vector<8x32xf32>
    %59 = tpu.matmul %54, %17, %cst_38 {dimension_numbers = #tpu.dot_dimension_numbers<[1], [0], [0], [1], [0, 0, 1, 1], [], []>} : vector<8x32xf32>, vector<32x32xf32>, vector<8x32xf32> -> vector<8x32xf32>
    %60 = vector.broadcast %20 : vector<1x32xf32> to vector<8x32xf32>
    %61 = arith.addf %59, %60 : vector<8x32xf32>
    %cst_39 = arith.constant dense<0.000000e+00> : vector<8x32xf32>
    %62 = tpu.matmul %54, %18, %cst_39 {dimension_numbers = #tpu.dot_dimension_numbers<[1], [0], [0], [1], [0, 0, 1, 1], [], []>} : vector<8x32xf32>, vector<32x32xf32>, vector<8x32xf32> -> vector<8x32xf32>
    %63 = vector.broadcast %21 : vector<1x32xf32> to vector<8x32xf32>
    %64 = arith.addf %62, %63 : vector<8x32xf32>
    %65 = vector.extract_strided_slice %5 {offsets = [8, 0], sizes = [8, 32], strides = [1, 1]} : vector<48x32xf32> to vector<8x32xf32>
    %66 = arith.addf %65, %58 : vector<8x32xf32>
    %67 = arith.negf %66 : vector<8x32xf32>
    %68 = math.exp %67 : vector<8x32xf32>
    %cst_40 = arith.constant 1.000000e+00 : f32
    %69 = vector.broadcast %cst_40 : f32 to vector<8x32xf32>
    %70 = arith.addf %69, %68 : vector<8x32xf32>
    %71 = arith.divf %69, %70 : vector<8x32xf32>
    %72 = vector.extract_strided_slice %10 {offsets = [8, 0], sizes = [8, 32], strides = [1, 1]} : vector<48x32xf32> to vector<8x32xf32>
    %73 = arith.addf %72, %61 : vector<8x32xf32>
    %74 = arith.negf %73 : vector<8x32xf32>
    %75 = math.exp %74 : vector<8x32xf32>
    %cst_41 = arith.constant 1.000000e+00 : f32
    %76 = vector.broadcast %cst_41 : f32 to vector<8x32xf32>
    %77 = arith.addf %76, %75 : vector<8x32xf32>
    %78 = arith.divf %76, %77 : vector<8x32xf32>
    %79 = vector.extract_strided_slice %15 {offsets = [8, 0], sizes = [8, 32], strides = [1, 1]} : vector<48x32xf32> to vector<8x32xf32>
    %80 = arith.mulf %71, %64 : vector<8x32xf32>
    %81 = arith.addf %79, %80 : vector<8x32xf32>
    %82 = math.tanh %81 : vector<8x32xf32>
    %cst_42 = arith.constant 1.000000e+00 : f32
    %83 = vector.broadcast %cst_42 : f32 to vector<8x32xf32>
    %84 = arith.subf %83, %78 : vector<8x32xf32>
    %85 = arith.mulf %84, %82 : vector<8x32xf32>
    %86 = arith.mulf %78, %54 : vector<8x32xf32>
    %87 = arith.addf %85, %86 : vector<8x32xf32>
    %c8 = arith.constant 8 : index
    %c0_43 = arith.constant 0 : index
    %88 = vector.load %arg17[%c8, %c0_43] : memref<48x32xf32, #tpu.memory_space<vmem>>, vector<8x32xf32>
    tpu.vector_store %arg17[%c8, %c0_43], %87 {strides = array<i32>} : memref<48x32xf32, #tpu.memory_space<vmem>>, vector<8x32xf32>,
    %cst_44 = arith.constant dense<0.000000e+00> : vector<8x32xf32>
    %89 = tpu.matmul %87, %16, %cst_44 {dimension_numbers = #tpu.dot_dimension_numbers<[1], [0], [0], [1], [0, 0, 1, 1], [], []>} : vector<8x32xf32>, vector<32x32xf32>, vector<8x32xf32> -> vector<8x32xf32>
    %90 = vector.broadcast %19 : vector<1x32xf32> to vector<8x32xf32>
    %91 = arith.addf %89, %90 : vector<8x32xf32>
    %cst_45 = arith.constant dense<0.000000e+00> : vector<8x32xf32>
    %92 = tpu.matmul %87, %17, %cst_45 {dimension_numbers = #tpu.dot_dimension_numbers<[1], [0], [0], [1], [0, 0, 1, 1], [], []>} : vector<8x32xf32>, vector<32x32xf32>, vector<8x32xf32> -> vector<8x32xf32>
    %93 = vector.broadcast %20 : vector<1x32xf32> to vector<8x32xf32>
    %94 = arith.addf %92, %93 : vector<8x32xf32>
    %cst_46 = arith.constant dense<0.000000e+00> : vector<8x32xf32>
    %95 = tpu.matmul %87, %18, %cst_46 {dimension_numbers = #tpu.dot_dimension_numbers<[1], [0], [0], [1], [0, 0, 1, 1], [], []>} : vector<8x32xf32>, vector<32x32xf32>, vector<8x32xf32> -> vector<8x32xf32>
    %96 = vector.broadcast %21 : vector<1x32xf32> to vector<8x32xf32>
    %97 = arith.addf %95, %96 : vector<8x32xf32>
    %98 = vector.extract_strided_slice %5 {offsets = [16, 0], sizes = [8, 32], strides = [1, 1]} : vector<48x32xf32> to vector<8x32xf32>
    %99 = arith.addf %98, %91 : vector<8x32xf32>
    %100 = arith.negf %99 : vector<8x32xf32>
    %101 = math.exp %100 : vector<8x32xf32>
    %cst_47 = arith.constant 1.000000e+00 : f32
    %102 = vector.broadcast %cst_47 : f32 to vector<8x32xf32>
    %103 = arith.addf %102, %101 : vector<8x32xf32>
    %104 = arith.divf %102, %103 : vector<8x32xf32>
    %105 = vector.extract_strided_slice %10 {offsets = [16, 0], sizes = [8, 32], strides = [1, 1]} : vector<48x32xf32> to vector<8x32xf32>
    %106 = arith.addf %105, %94 : vector<8x32xf32>
    %107 = arith.negf %106 : vector<8x32xf32>
    %108 = math.exp %107 : vector<8x32xf32>
    %cst_48 = arith.constant 1.000000e+00 : f32
    %109 = vector.broadcast %cst_48 : f32 to vector<8x32xf32>
    %110 = arith.addf %109, %108 : vector<8x32xf32>
    %111 = arith.divf %109, %110 : vector<8x32xf32>
    %112 = vector.extract_strided_slice %15 {offsets = [16, 0], sizes = [8, 32], strides = [1, 1]} : vector<48x32xf32> to vector<8x32xf32>
    %113 = arith.mulf %104, %97 : vector<8x32xf32>
    %114 = arith.addf %112, %113 : vector<8x32xf32>
    %115 = math.tanh %114 : vector<8x32xf32>
    %cst_49 = arith.constant 1.000000e+00 : f32
    %116 = vector.broadcast %cst_49 : f32 to vector<8x32xf32>
    %117 = arith.subf %116, %111 : vector<8x32xf32>
    %118 = arith.mulf %117, %115 : vector<8x32xf32>
    %119 = arith.mulf %111, %87 : vector<8x32xf32>
    %120 = arith.addf %118, %119 : vector<8x32xf32>
    %c16 = arith.constant 16 : index
    %c0_50 = arith.constant 0 : index
    %121 = vector.load %arg17[%c16, %c0_50] : memref<48x32xf32, #tpu.memory_space<vmem>>, vector<8x32xf32>
    tpu.vector_store %arg17[%c16, %c0_50], %120 {strides = array<i32>} : memref<48x32xf32, #tpu.memory_space<vmem>>, vector<8x32xf32>,
    %cst_51 = arith.constant dense<0.000000e+00> : vector<8x32xf32>
    %122 = tpu.matmul %120, %16, %cst_51 {dimension_numbers = #tpu.dot_dimension_numbers<[1], [0], [0], [1], [0, 0, 1, 1], [], []>} : vector<8x32xf32>, vector<32x32xf32>, vector<8x32xf32> -> vector<8x32xf32>
    %123 = vector.broadcast %19 : vector<1x32xf32> to vector<8x32xf32>
    %124 = arith.addf %122, %123 : vector<8x32xf32>
    %cst_52 = arith.constant dense<0.000000e+00> : vector<8x32xf32>
    %125 = tpu.matmul %120, %17, %cst_52 {dimension_numbers = #tpu.dot_dimension_numbers<[1], [0], [0], [1], [0, 0, 1, 1], [], []>} : vector<8x32xf32>, vector<32x32xf32>, vector<8x32xf32> -> vector<8x32xf32>
    %126 = vector.broadcast %20 : vector<1x32xf32> to vector<8x32xf32>
    %127 = arith.addf %125, %126 : vector<8x32xf32>
    %cst_53 = arith.constant dense<0.000000e+00> : vector<8x32xf32>
    %128 = tpu.matmul %120, %18, %cst_53 {dimension_numbers = #tpu.dot_dimension_numbers<[1], [0], [0], [1], [0, 0, 1, 1], [], []>} : vector<8x32xf32>, vector<32x32xf32>, vector<8x32xf32> -> vector<8x32xf32>
    %129 = vector.broadcast %21 : vector<1x32xf32> to vector<8x32xf32>
    %130 = arith.addf %128, %129 : vector<8x32xf32>
    %131 = vector.extract_strided_slice %5 {offsets = [24, 0], sizes = [8, 32], strides = [1, 1]} : vector<48x32xf32> to vector<8x32xf32>
    %132 = arith.addf %131, %124 : vector<8x32xf32>
    %133 = arith.negf %132 : vector<8x32xf32>
    %134 = math.exp %133 : vector<8x32xf32>
    %cst_54 = arith.constant 1.000000e+00 : f32
    %135 = vector.broadcast %cst_54 : f32 to vector<8x32xf32>
    %136 = arith.addf %135, %134 : vector<8x32xf32>
    %137 = arith.divf %135, %136 : vector<8x32xf32>
    %138 = vector.extract_strided_slice %10 {offsets = [24, 0], sizes = [8, 32], strides = [1, 1]} : vector<48x32xf32> to vector<8x32xf32>
    %139 = arith.addf %138, %127 : vector<8x32xf32>
    %140 = arith.negf %139 : vector<8x32xf32>
    %141 = math.exp %140 : vector<8x32xf32>
    %cst_55 = arith.constant 1.000000e+00 : f32
    %142 = vector.broadcast %cst_55 : f32 to vector<8x32xf32>
    %143 = arith.addf %142, %141 : vector<8x32xf32>
    %144 = arith.divf %142, %143 : vector<8x32xf32>
    %145 = vector.extract_strided_slice %15 {offsets = [24, 0], sizes = [8, 32], strides = [1, 1]} : vector<48x32xf32> to vector<8x32xf32>
    %146 = arith.mulf %137, %130 : vector<8x32xf32>
    %147 = arith.addf %145, %146 : vector<8x32xf32>
    %148 = math.tanh %147 : vector<8x32xf32>
    %cst_56 = arith.constant 1.000000e+00 : f32
    %149 = vector.broadcast %cst_56 : f32 to vector<8x32xf32>
    %150 = arith.subf %149, %144 : vector<8x32xf32>
    %151 = arith.mulf %150, %148 : vector<8x32xf32>
    %152 = arith.mulf %144, %120 : vector<8x32xf32>
    %153 = arith.addf %151, %152 : vector<8x32xf32>
    %c24 = arith.constant 24 : index
    %c0_57 = arith.constant 0 : index
    %154 = vector.load %arg17[%c24, %c0_57] : memref<48x32xf32, #tpu.memory_space<vmem>>, vector<8x32xf32>
    tpu.vector_store %arg17[%c24, %c0_57], %153 {strides = array<i32>} : memref<48x32xf32, #tpu.memory_space<vmem>>, vector<8x32xf32>,
    %cst_58 = arith.constant dense<0.000000e+00> : vector<8x32xf32>
    %155 = tpu.matmul %153, %16, %cst_58 {dimension_numbers = #tpu.dot_dimension_numbers<[1], [0], [0], [1], [0, 0, 1, 1], [], []>} : vector<8x32xf32>, vector<32x32xf32>, vector<8x32xf32> -> vector<8x32xf32>
    %156 = vector.broadcast %19 : vector<1x32xf32> to vector<8x32xf32>
    %157 = arith.addf %155, %156 : vector<8x32xf32>
    %cst_59 = arith.constant dense<0.000000e+00> : vector<8x32xf32>
    %158 = tpu.matmul %153, %17, %cst_59 {dimension_numbers = #tpu.dot_dimension_numbers<[1], [0], [0], [1], [0, 0, 1, 1], [], []>} : vector<8x32xf32>, vector<32x32xf32>, vector<8x32xf32> -> vector<8x32xf32>
    %159 = vector.broadcast %20 : vector<1x32xf32> to vector<8x32xf32>
    %160 = arith.addf %158, %159 : vector<8x32xf32>
    %cst_60 = arith.constant dense<0.000000e+00> : vector<8x32xf32>
    %161 = tpu.matmul %153, %18, %cst_60 {dimension_numbers = #tpu.dot_dimension_numbers<[1], [0], [0], [1], [0, 0, 1, 1], [], []>} : vector<8x32xf32>, vector<32x32xf32>, vector<8x32xf32> -> vector<8x32xf32>
    %162 = vector.broadcast %21 : vector<1x32xf32> to vector<8x32xf32>
    %163 = arith.addf %161, %162 : vector<8x32xf32>
    %164 = vector.extract_strided_slice %5 {offsets = [32, 0], sizes = [8, 32], strides = [1, 1]} : vector<48x32xf32> to vector<8x32xf32>
    %165 = arith.addf %164, %157 : vector<8x32xf32>
    %166 = arith.negf %165 : vector<8x32xf32>
    %167 = math.exp %166 : vector<8x32xf32>
    %cst_61 = arith.constant 1.000000e+00 : f32
    %168 = vector.broadcast %cst_61 : f32 to vector<8x32xf32>
    %169 = arith.addf %168, %167 : vector<8x32xf32>
    %170 = arith.divf %168, %169 : vector<8x32xf32>
    %171 = vector.extract_strided_slice %10 {offsets = [32, 0], sizes = [8, 32], strides = [1, 1]} : vector<48x32xf32> to vector<8x32xf32>
    %172 = arith.addf %171, %160 : vector<8x32xf32>
    %173 = arith.negf %172 : vector<8x32xf32>
    %174 = math.exp %173 : vector<8x32xf32>
    %cst_62 = arith.constant 1.000000e+00 : f32
    %175 = vector.broadcast %cst_62 : f32 to vector<8x32xf32>
    %176 = arith.addf %175, %174 : vector<8x32xf32>
    %177 = arith.divf %175, %176 : vector<8x32xf32>
    %178 = vector.extract_strided_slice %15 {offsets = [32, 0], sizes = [8, 32], strides = [1, 1]} : vector<48x32xf32> to vector<8x32xf32>
    %179 = arith.mulf %170, %163 : vector<8x32xf32>
    %180 = arith.addf %178, %179 : vector<8x32xf32>
    %181 = math.tanh %180 : vector<8x32xf32>
    %cst_63 = arith.constant 1.000000e+00 : f32
    %182 = vector.broadcast %cst_63 : f32 to vector<8x32xf32>
    %183 = arith.subf %182, %177 : vector<8x32xf32>
    %184 = arith.mulf %183, %181 : vector<8x32xf32>
    %185 = arith.mulf %177, %153 : vector<8x32xf32>
    %186 = arith.addf %184, %185 : vector<8x32xf32>
    %c32 = arith.constant 32 : index
    %c0_64 = arith.constant 0 : index
    %187 = vector.load %arg17[%c32, %c0_64] : memref<48x32xf32, #tpu.memory_space<vmem>>, vector<8x32xf32>
    tpu.vector_store %arg17[%c32, %c0_64], %186 {strides = array<i32>} : memref<48x32xf32, #tpu.memory_space<vmem>>, vector<8x32xf32>,
    %cst_65 = arith.constant dense<0.000000e+00> : vector<8x32xf32>
    %188 = tpu.matmul %186, %16, %cst_65 {dimension_numbers = #tpu.dot_dimension_numbers<[1], [0], [0], [1], [0, 0, 1, 1], [], []>} : vector<8x32xf32>, vector<32x32xf32>, vector<8x32xf32> -> vector<8x32xf32>
    %189 = vector.broadcast %19 : vector<1x32xf32> to vector<8x32xf32>
    %190 = arith.addf %188, %189 : vector<8x32xf32>
    %cst_66 = arith.constant dense<0.000000e+00> : vector<8x32xf32>
    %191 = tpu.matmul %186, %17, %cst_66 {dimension_numbers = #tpu.dot_dimension_numbers<[1], [0], [0], [1], [0, 0, 1, 1], [], []>} : vector<8x32xf32>, vector<32x32xf32>, vector<8x32xf32> -> vector<8x32xf32>
    %192 = vector.broadcast %20 : vector<1x32xf32> to vector<8x32xf32>
    %193 = arith.addf %191, %192 : vector<8x32xf32>
    %cst_67 = arith.constant dense<0.000000e+00> : vector<8x32xf32>
    %194 = tpu.matmul %186, %18, %cst_67 {dimension_numbers = #tpu.dot_dimension_numbers<[1], [0], [0], [1], [0, 0, 1, 1], [], []>} : vector<8x32xf32>, vector<32x32xf32>, vector<8x32xf32> -> vector<8x32xf32>
    %195 = vector.broadcast %21 : vector<1x32xf32> to vector<8x32xf32>
    %196 = arith.addf %194, %195 : vector<8x32xf32>
    %197 = vector.extract_strided_slice %5 {offsets = [40, 0], sizes = [8, 32], strides = [1, 1]} : vector<48x32xf32> to vector<8x32xf32>
    %198 = arith.addf %197, %190 : vector<8x32xf32>
    %199 = arith.negf %198 : vector<8x32xf32>
    %200 = math.exp %199 : vector<8x32xf32>
    %cst_68 = arith.constant 1.000000e+00 : f32
    %201 = vector.broadcast %cst_68 : f32 to vector<8x32xf32>
    %202 = arith.addf %201, %200 : vector<8x32xf32>
    %203 = arith.divf %201, %202 : vector<8x32xf32>
    %204 = vector.extract_strided_slice %10 {offsets = [40, 0], sizes = [8, 32], strides = [1, 1]} : vector<48x32xf32> to vector<8x32xf32>
    %205 = arith.addf %204, %193 : vector<8x32xf32>
    %206 = arith.negf %205 : vector<8x32xf32>
    %207 = math.exp %206 : vector<8x32xf32>
    %cst_69 = arith.constant 1.000000e+00 : f32
    %208 = vector.broadcast %cst_69 : f32 to vector<8x32xf32>
    %209 = arith.addf %208, %207 : vector<8x32xf32>
    %210 = arith.divf %208, %209 : vector<8x32xf32>
    %211 = vector.extract_strided_slice %15 {offsets = [40, 0], sizes = [8, 32], strides = [1, 1]} : vector<48x32xf32> to vector<8x32xf32>
    %212 = arith.mulf %203, %196 : vector<8x32xf32>
    %213 = arith.addf %211, %212 : vector<8x32xf32>
    %214 = math.tanh %213 : vector<8x32xf32>
    %cst_70 = arith.constant 1.000000e+00 : f32
    %215 = vector.broadcast %cst_70 : f32 to vector<8x32xf32>
    %216 = arith.subf %215, %210 : vector<8x32xf32>
    %217 = arith.mulf %216, %214 : vector<8x32xf32>
    %218 = arith.mulf %210, %186 : vector<8x32xf32>
    %219 = arith.addf %217, %218 : vector<8x32xf32>
    %c40 = arith.constant 40 : index
    %c0_71 = arith.constant 0 : index
    %220 = vector.load %arg17[%c40, %c0_71] : memref<48x32xf32, #tpu.memory_space<vmem>>, vector<8x32xf32>
    tpu.vector_store %arg17[%c40, %c0_71], %219 {strides = array<i32>} : memref<48x32xf32, #tpu.memory_space<vmem>>, vector<8x32xf32>,
    %c0_72 = arith.constant 0 : index
    %c0_73 = arith.constant 0 : index
    %221 = vector.load %arg17[%c0_72, %c0_73] : memref<48x32xf32, #tpu.memory_space<vmem>>, vector<48x32xf32>
    %222 = arith.truncf %221 : vector<48x32xf32> to vector<48x32xbf16>
    %c0_74 = arith.constant 0 : index
    %c0_75 = arith.constant 0 : index
    %223 = vector.load %arg14[%c0_74, %c0_75] : memref<32x256xbf16, #tpu.memory_space<vmem>>, vector<32x256xbf16>
    %cst_76 = arith.constant dense<0.000000e+00> : vector<48x256xf32>
    %224 = tpu.matmul %222, %223, %cst_76 {dimension_numbers = #tpu.dot_dimension_numbers<[1], [0], [0], [1], [0, 0, 1, 1], [], []>} : vector<48x32xbf16>, vector<32x256xbf16>, vector<48x256xf32> -> vector<48x256xf32>
    %c0_77 = arith.constant 0 : index
    %c0_78 = arith.constant 0 : index
    %225 = vector.load %arg15[%c0_77, %c0_78] : memref<1x256xf32, #tpu.memory_space<vmem>>, vector<1x256xf32>
    %226 = vector.broadcast %225 : vector<1x256xf32> to vector<48x256xf32>
    %227 = arith.addf %224, %226 : vector<48x256xf32>
    %cst_79 = arith.constant dense<0xFF800000> : vector<48xf32>
    %228 = vector.multi_reduction <maximumf>, %227, %cst_79 [1] : vector<48x256xf32> to vector<48xf32>
    %229 = vector.shape_cast %228 : vector<48xf32> to vector<48x1xf32>
    %230 = vector.broadcast %229 : vector<48x1xf32> to vector<48x256xf32>
    %231 = arith.subf %227, %230 : vector<48x256xf32>
    %232 = math.exp %231 : vector<48x256xf32>
    %cst_80 = arith.constant dense<0.000000e+00> : vector<48xf32>
    %233 = vector.multi_reduction <add>, %232, %cst_80 [1] : vector<48x256xf32> to vector<48xf32>
    %234 = vector.shape_cast %233 : vector<48xf32> to vector<48x1xf32>
    %235 = math.log %234 : vector<48x1xf32>
    %236 = arith.addf %235, %229 : vector<48x1xf32>
    %237 = vector.broadcast %236 : vector<48x1xf32> to vector<48x256xf32>
    %238 = arith.subf %227, %237 : vector<48x256xf32>
    %c0_81 = arith.constant 0 : index
    %c0_82 = arith.constant 0 : index
    %239 = vector.load %arg16[%c0_81, %c0_82] : memref<48x256xf32, #tpu.memory_space<vmem>>, vector<48x256xf32>
    tpu.vector_store %arg16[%c0_81, %c0_82], %238 {strides = array<i32>} : memref<48x256xf32, #tpu.memory_space<vmem>>, vector<48x256xf32>,
    return
  }
}

</mosaic_0001>

<llo_original>
// kernel: tpu_custom_call.1
$region0: #{tpu_custom_call.1}
  #allocation0 [shape = 'u32[]', space=smem, size = 0x4, offset = 0x4, fixed_abs, tag = 'smem constant byte address 0x4 - core index']
  #allocation1 [shape = 'u32[72,128]{1,0:T(1,128)}', space=vmem, size = 0x9000, scoped, tag = 'internal scratch']
  #allocation2 [shape = 'f32[48,32]{1,0:T(8,128)}', space=vmem, size = 0x6000, scoped, tag = 'scratch operand']
  %s0 = inlined_call_operand.vmem [shape: bf16[48,32], index: 0, kind: input, shape index: {}]
  %s1 = inlined_call_operand.vmem [shape: f32[8,32], index: 1, kind: input, shape index: {}]
  %s2 = inlined_call_operand.hbm [shape: bf16[32,32], index: 2, kind: input, shape index: {}]
  %s3 = inlined_call_operand.hbm [shape: bf16[32,32], index: 3, kind: input, shape index: {}]
  %s4 = inlined_call_operand.hbm [shape: bf16[32,32], index: 4, kind: input, shape index: {}]
  %s5 = inlined_call_operand.vmem [shape: f32[1,32], index: 5, kind: input, shape index: {}]
  %s6 = inlined_call_operand.vmem [shape: f32[1,32], index: 6, kind: input, shape index: {}]
  %s7 = inlined_call_operand.vmem [shape: f32[1,32], index: 7, kind: input, shape index: {}]
  %s8 = inlined_call_operand.vmem [shape: f32[32,32], index: 8, kind: input, shape index: {}]
  %s9 = inlined_call_operand.hbm [shape: f32[32,32], index: 9, kind: input, shape index: {}]
  %s10 = inlined_call_operand.hbm [shape: f32[32,32], index: 10, kind: input, shape index: {}]
  %s11 = inlined_call_operand.vmem [shape: f32[1,32], index: 11, kind: input, shape index: {}]
  %s12 = inlined_call_operand.vmem [shape: f32[1,32], index: 12, kind: input, shape index: {}]
  %s13 = inlined_call_operand.vmem [shape: f32[1,32], index: 13, kind: input, shape index: {}]
  %s14 = inlined_call_operand.hbm [shape: bf16[32,256], index: 14, kind: input, shape index: {}]
  %s15 = inlined_call_operand.vmem [shape: f32[1,256], index: 15, kind: input, shape index: {}]
  %s16 = inlined_call_operand.hbm [shape: f32[48,256], index: 16, kind: output, shape index: {}]
  %s17 = sld [smem:[#allocation0]]
  $region98: #{tpu_custom_call.1} parent=0
    _
  %s19 = ssub.s32 1, %s17
  %s20 = scalar_select 0, %s19, %s17
  $region1: #{tpu_custom_call.1} parent=0
    #allocation3 [shape = 'u8[8192]{0}', space=vmem, size = 0x2000, scoped, tag = 'input window, operand 2, single buffered']
    #allocation4 [shape = 's32[1]{0}', space=sflag, size = 0x4, scoped, tag = 'scoped memory for tpu_custom_call.1']
    #allocation5 [shape = 's32[1]{0}', space=sflag, size = 0x4, scoped, tag = 'scoped memory for tpu_custom_call.1']
    #allocation6 [shape = 'u8[8192]{0}', space=vmem, size = 0x2000, scoped, tag = 'input window, operand 3, single buffered']
    #allocation7 [shape = 's32[1]{0}', space=sflag, size = 0x4, scoped, tag = 'scoped memory for tpu_custom_call.1']
    #allocation8 [shape = 'u8[8192]{0}', space=vmem, size = 0x2000, scoped, tag = 'input window, operand 4, single buffered']
    #allocation9 [shape = 'u8[16384]{0}', space=vmem, size = 0x4000, scoped, tag = 'input window, operand 9, single buffered']
    #allocation10 [shape = 's32[1]{0}', space=sflag, size = 0x4, scoped, tag = 'scoped memory for tpu_custom_call.1']
    #allocation11 [shape = 'u8[16384]{0}', space=vmem, size = 0x4000, scoped, tag = 'input window, operand 10, single buffered']
    #allocation12 [shape = 'u8[16384]{0}', space=vmem, size = 0x4000, scoped, tag = 'input window, operand 14, single buffered']
    #allocation13 [shape = 's32[1]{0}', space=sflag, size = 0x4, scoped, tag = 'scoped memory for tpu_custom_call.1']
    #allocation14 [shape = 'u8[49152]{0}', space=vmem, size = 0xc000, scoped, tag = 'output window, operand 0, single buffered']
    %21 = vsyncpa [#allocation4], 0
    %22 = vsyncpa [#allocation7], 0
    %23 = vsyncpa [#allocation10], 0
    %24 = vsyncpa [#allocation13], 0
    %25 = vsyncpa [#allocation5], 0
    // Predicated region
    $region2: #{tpu_custom_call.1} parent=1 // pred_check
      _
    $region3: #{tpu_custom_call.1} parent=1 // pred_check_branch
      %27 = sbr.rel (0) target = $region5
    $region4: #{tpu_custom_call.1} parent=1 // pred_region
      _
    $region5: #{tpu_custom_call.1} parent=1 // pred_fallthru
      _
    // Predicated region
    $region6: #{tpu_custom_call.1} parent=1 // pred_check
      _
    $region7: #{tpu_custom_call.1} parent=1 // pred_check_branch
      %29 = sbr.rel (0) target = $region9
    $region8: #{tpu_custom_call.1} parent=1 // pred_region
      _
    $region9: #{tpu_custom_call.1} parent=1 // pred_fallthru
      _
    // Predicated region
    $region10: #{tpu_custom_call.1} parent=1 // pred_check
      _
    $region11: #{tpu_custom_call.1} parent=1 // pred_check_branch
      %31 = sbr.rel (0) target = $region13
    $region12: #{tpu_custom_call.1} parent=1 // pred_region
      %33 = vsyncadd [#allocation4], 0
      %s34 = sshll.u32 %s2, 4
      %s35 = int_to_ptr.hbm [resolvable:$true] %s34
      %s36 = sshll.u32 [#allocation3], 4
      %s37 = int_to_ptr.vmem [resolvable:$true] %s36
      %42 = dma.hbm_to_vmem [thread:$0]  %s35, 256, %s37, [#allocation4], 64, 64, 4
    $region13: #{tpu_custom_call.1} parent=1 // pred_fallthru
      _
    // Predicated region
    $region14: #{tpu_custom_call.1} parent=1 // pred_check
      _
    $region15: #{tpu_custom_call.1} parent=1 // pred_check_branch
      %44 = sbr.rel (0) target = $region17
    $region16: #{tpu_custom_call.1} parent=1 // pred_region
      %46 = vsyncadd [#allocation7], 0
      %s47 = sshll.u32 %s3, 4
      %s48 = int_to_ptr.hbm [resolvable:$true] %s47
      %s49 = sshll.u32 [#allocation6], 4
      %s50 = int_to_ptr.vmem [resolvable:$true] %s49
      %55 = dma.hbm_to_vmem [thread:$0]  %s48, 256, %s50, [#allocation7], 64, 64, 4
    $region17: #{tpu_custom_call.1} parent=1 // pred_fallthru
      _
    // Predicated region
    $region18: #{tpu_custom_call.1} parent=1 // pred_check
      _
    $region19: #{tpu_custom_call.1} parent=1 // pred_check_branch
      %57 = sbr.rel (0) target = $region21
    $region20: #{tpu_custom_call.1} parent=1 // pred_region
      %59 = vsyncadd [#allocation7], 0
      %s60 = sshll.u32 %s4, 4
      %s61 = int_to_ptr.hbm [resolvable:$true] %s60
      %s62 = sshll.u32 [#allocation8], 4
      %s63 = int_to_ptr.vmem [resolvable:$true] %s62
      %68 = dma.hbm_to_vmem [thread:$0]  %s61, 256, %s63, [#allocation7], 64, 64, 4
    $region21: #{tpu_custom_call.1} parent=1 // pred_fallthru
      _
    // Predicated region
    $region22: #{tpu_custom_call.1} parent=1 // pred_check
      _
    $region23: #{tpu_custom_call.1} parent=1 // pred_check_branch
      %70 = sbr.rel (0) target = $region25
    $region24: #{tpu_custom_call.1} parent=1 // pred_region
      _
    $region25: #{tpu_custom_call.1} parent=1 // pred_fallthru
      _
    // Predicated region
    $region26: #{tpu_custom_call.1} parent=1 // pred_check
      _
    $region27: #{tpu_custom_call.1} parent=1 // pred_check_branch
      %72 = sbr.rel (0) target = $region29
    $region28: #{tpu_custom_call.1} parent=1 // pred_region
      _
    $region29: #{tpu_custom_call.1} parent=1 // pred_fallthru
      _
    // Predicated region
    $region30: #{tpu_custom_call.1} parent=1 // pred_check
      _
    $region31: #{tpu_custom_call.1} parent=1 // pred_check_branch
      %74 = sbr.rel (0) target = $region33
    $region32: #{tpu_custom_call.1} parent=1 // pred_region
      _
    $region33: #{tpu_custom_call.1} parent=1 // pred_fallthru
      _
    // Predicated region
    $region34: #{tpu_custom_call.1} parent=1 // pred_check
      _
    $region35: #{tpu_custom_call.1} parent=1 // pred_check_branch
      %76 = sbr.rel (0) target = $region37
    $region36: #{tpu_custom_call.1} parent=1 // pred_region
      _
    $region37: #{tpu_custom_call.1} parent=1 // pred_fallthru
      _
    // Predicated region
    $region38: #{tpu_custom_call.1} parent=1 // pred_check
      _
    $region39: #{tpu_custom_call.1} parent=1 // pred_check_branch
      %78 = sbr.rel (0) target = $region41
    $region40: #{tpu_custom_call.1} parent=1 // pred_region
      %80 = vsyncadd [#allocation10], 0
      %s81 = sshll.u32 %s9, 4
      %s82 = int_to_ptr.hbm [resolvable:$true] %s81
      %s83 = sshll.u32 [#allocation9], 4
      %s84 = int_to_ptr.vmem [resolvable:$true] %s83
      %89 = dma.hbm_to_vmem [thread:$0]  %s82, 512, %s84, [#allocation10], 128, 128, 8
    $region41: #{tpu_custom_call.1} parent=1 // pred_fallthru
      _
    // Predicated region
    $region42: #{tpu_custom_call.1} parent=1 // pred_check
      _
    $region43: #{tpu_custom_call.1} parent=1 // pred_check_branch
      %91 = sbr.rel (0) target = $region45
    $region44: #{tpu_custom_call.1} parent=1 // pred_region
      %93 = vsyncadd [#allocation10], 0
      %s94 = sshll.u32 %s10, 4
      %s95 = int_to_ptr.hbm [resolvable:$true] %s94
      %s96 = sshll.u32 [#allocation11], 4
      %s97 = int_to_ptr.vmem [resolvable:$true] %s96
      %102 = dma.hbm_to_vmem [thread:$0]  %s95, 512, %s97, [#allocation10], 128, 128, 8
    $region45: #{tpu_custom_call.1} parent=1 // pred_fallthru
      _
    // Predicated region
    $region46: #{tpu_custom_call.1} parent=1 // pred_check
      _
    $region47: #{tpu_custom_call.1} parent=1 // pred_check_branch
      %104 = sbr.rel (0) target = $region49
    $region48: #{tpu_custom_call.1} parent=1 // pred_region
      _
    $region49: #{tpu_custom_call.1} parent=1 // pred_fallthru
      _
    // Predicated region
    $region50: #{tpu_custom_call.1} parent=1 // pred_check
      _
    $region51: #{tpu_custom_call.1} parent=1 // pred_check_branch
      %106 = sbr.rel (0) target = $region53
    $region52: #{tpu_custom_call.1} parent=1 // pred_region
      _
    $region53: #{tpu_custom_call.1} parent=1 // pred_fallthru
      _
    // Predicated region
    $region54: #{tpu_custom_call.1} parent=1 // pred_check
      _
    $region55: #{tpu_custom_call.1} parent=1 // pred_check_branch
      %108 = sbr.rel (0) target = $region57
    $region56: #{tpu_custom_call.1} parent=1 // pred_region
      _
    $region57: #{tpu_custom_call.1} parent=1 // pred_fallthru
      _
    // Predicated region
    $region58: #{tpu_custom_call.1} parent=1 // pred_check
      _
    $region59: #{tpu_custom_call.1} parent=1 // pred_check_branch
      %110 = sbr.rel (0) target = $region61
    $region60: #{tpu_custom_call.1} parent=1 // pred_region
      %112 = vsyncadd [#allocation13], 0
      %s113 = sshll.u32 %s14, 4
      %s114 = int_to_ptr.hbm [resolvable:$true] %s113
      %s115 = sshll.u32 [#allocation12], 4
      %s116 = int_to_ptr.vmem [resolvable:$true] %s115
      %121 = dma.hbm_to_vmem [thread:$0]  %s114, 512, %s116, [#allocation13], 128, 128, 8
    $region61: #{tpu_custom_call.1} parent=1 // pred_fallthru
      _
    // Predicated region
    $region62: #{tpu_custom_call.1} parent=1 // pred_check
      _
    $region63: #{tpu_custom_call.1} parent=1 // pred_check_branch
      %123 = sbr.rel (0) target = $region65
    $region64: #{tpu_custom_call.1} parent=1 // pred_region
      _
    $region65: #{tpu_custom_call.1} parent=1 // pred_fallthru
      _
    // Predicated region
    $region66: #{tpu_custom_call.1} parent=1 // pred_check
      _
    $region67: #{tpu_custom_call.1} parent=1 // pred_check_branch
      %125 = sbr.rel (0) target = $region69
    $region68: #{tpu_custom_call.1} parent=1 // pred_region
      %127 = dma.done [#allocation4], 256
    $region69: #{tpu_custom_call.1} parent=1 // pred_fallthru
      _
    // Predicated region
    $region70: #{tpu_custom_call.1} parent=1 // pred_check
      _
    $region71: #{tpu_custom_call.1} parent=1 // pred_check_branch
      %129 = sbr.rel (0) target = $region73
    $region72: #{tpu_custom_call.1} parent=1 // pred_region
      %131 = dma.done [#allocation7], 256
    $region73: #{tpu_custom_call.1} parent=1 // pred_fallthru
      _
    // Predicated region
    $region74: #{tpu_custom_call.1} parent=1 // pred_check
      _
    $region75: #{tpu_custom_call.1} parent=1 // pred_check_branch
      %133 = sbr.rel (0) target = $region77
    $region76: #{tpu_custom_call.1} parent=1 // pred_region
      %135 = dma.done [#allocation7], 256
    $region77: #{tpu_custom_call.1} parent=1 // pred_fallthru
      _
    // Predicated region
    $region78: #{tpu_custom_call.1} parent=1 // pred_check
      _
    $region79: #{tpu_custom_call.1} parent=1 // pred_check_branch
      %137 = sbr.rel (0) target = $region81
    $region80: #{tpu_custom_call.1} parent=1 // pred_region
      %139 = dma.done [#allocation10], 512
    $region81: #{tpu_custom_call.1} parent=1 // pred_fallthru
      _
    // Predicated region
    $region82: #{tpu_custom_call.1} parent=1 // pred_check
      _
    $region83: #{tpu_custom_call.1} parent=1 // pred_check_branch
      %141 = sbr.rel (0) target = $region85
    $region84: #{tpu_custom_call.1} parent=1 // pred_region
      %143 = dma.done [#allocation10], 512
    $region85: #{tpu_custom_call.1} parent=1 // pred_fallthru
      _
    // Predicated region
    $region86: #{tpu_custom_call.1} parent=1 // pred_check
      _
    $region87: #{tpu_custom_call.1} parent=1 // pred_check_branch
      %145 = sbr.rel (0) target = $region89
    $region88: #{tpu_custom_call.1} parent=1 // pred_region
      %147 = dma.done [#allocation13], 512
    $region89: #{tpu_custom_call.1} parent=1 // pred_fallthru
      _
    %v149 = vld [vmem:[%s0] sm:$0xf]
    %v150 = vld [vmem:[%s0 + $0x4] sm:$0xf]
    %v151 = vld [vmem:[%s0 + $0x8] sm:$0xf]
    %v152 = vld [vmem:[%s0 + $0xc] sm:$0xf]
    %v153 = vld [vmem:[%s0 + $0x10] sm:$0xf]
    %v154 = vld [vmem:[%s0 + $0x14] sm:$0xf]
    %v155 = vld [vmem:[#allocation3] sm:$0xf]
    %v156 = vld [vmem:[#allocation3 + $0x4] sm:$0xf]
    %v157 = vld [vmem:[#allocation3 + $0x8] sm:$0xf]
    %v158 = vld [vmem:[#allocation3 + $0xc] sm:$0xf]
    %v159 = vld [vmem:[%s5] sm:$0x1]
    %v161 = vperm.slane %v159, 0
    %v169 = vunpack.c.l.b16 %v149
    %v170 = vunpack.c.l.b16 %v150
    %v171 = vunpack.c.l.b16 %v151
    %v172 = vunpack.c.l.b16 %v152
    %v173 = vunpack.c.l.b16 %v153
    %v174 = vunpack.c.l.b16 %v154
    %v175 = vpack.c.b16 %v170, %v169
    %v176 = vpack.c.b16 %v172, %v171
    %v177 = vpack.c.b16 %v174, %v173
    %v182 = vunpack.c.l.b16 %v155
    %v183 = vunpack.c.l.b16 %v156
    %v184 = vunpack.c.l.b16 %v157
    %v185 = vunpack.c.l.b16 %v158
    %v186 = vpack.c.b16 %v183, %v182
    %v187 = vpack.c.b16 %v185, %v184
    %vm190 = vcmask 261120
    %v192 = vsel %vm190, %v175, 0
    %v195 = vsel %vm190, %v176, 0
    %v198 = vsel %vm190, %v177, 0
    %200 = vmatpush.bf16.msra.mxu0 0
    %201 = vmatpush.bf16.msra.mxu0 0
    %202 = vmatpush.bf16.msra.mxu0 0
    %203 = vmatpush.bf16.msra.mxu0 0
    %204 = vmatpush.bf16.msra.mxu0 0
    %205 = vmatpush.bf16.msra.mxu0 0
    %206 = vmatpush.bf16.msra.mxu0 %v187
    %207 = vmatpush.bf16.msra.mxu0 %v186
    %208 = vmatmul.bf16.gmra.mxu0 %v192
    %v209 = vpop.f32.mrf.mxu0
    %v210 = vadd.f32 %v161, %v209
    %v211 = vpop.f32.mrf.mxu0
    %v212 = vadd.f32 %v161, %v211
    %213 = vmatmul.bf16.gmra.mxu0 %v195
    %v214 = vpop.f32.mrf.mxu0
    %v215 = vadd.f32 %v161, %v214
    %v216 = vpop.f32.mrf.mxu0
    %v217 = vadd.f32 %v161, %v216
    %218 = vmatmul.bf16.gmra.mxu0 %v198
    %v219 = vpop.f32.mrf.mxu0
    %v220 = vadd.f32 %v161, %v219
    %v221 = vpop.f32.mrf.mxu0
    %v222 = vadd.f32 %v161, %v221
    %223 = vdwg.mxu0
    %v224 = vld [vmem:[#allocation6] sm:$0xf]
    %v225 = vld [vmem:[#allocation6 + $0x4] sm:$0xf]
    %v226 = vld [vmem:[#allocation6 + $0x8] sm:$0xf]
    %v227 = vld [vmem:[#allocation6 + $0xc] sm:$0xf]
    %v228 = vld [vmem:[%s6] sm:$0x1]
    %v230 = vperm.slane %v228, 0
    %v236 = vunpack.c.l.b16 %v224
    %v237 = vunpack.c.l.b16 %v225
    %v238 = vunpack.c.l.b16 %v226
    %v239 = vunpack.c.l.b16 %v227
    %v240 = vpack.c.b16 %v237, %v236
    %v241 = vpack.c.b16 %v239, %v238
    %244 = vmatpush.bf16.msra.mxu0 0
    %245 = vmatpush.bf16.msra.mxu0 0
    %246 = vmatpush.bf16.msra.mxu0 0
    %247 = vmatpush.bf16.msra.mxu0 0
    %248 = vmatpush.bf16.msra.mxu0 0
    %249 = vmatpush.bf16.msra.mxu0 0
    %250 = vmatpush.bf16.msra.mxu0 %v241
    %251 = vmatpush.bf16.msra.mxu0 %v240
    %252 = vmatmul.bf16.gmra.mxu0 %v192
    %v253 = vpop.f32.mrf.mxu0
    %v254 = vadd.f32 %v230, %v253
    %v255 = vpop.f32.mrf.mxu0
    %v256 = vadd.f32 %v230, %v255
    %257 = vmatmul.bf16.gmra.mxu0 %v195
    %v258 = vpop.f32.mrf.mxu0
    %v259 = vadd.f32 %v230, %v258
    %v260 = vpop.f32.mrf.mxu0
    %v261 = vadd.f32 %v230, %v260
    %262 = vmatmul.bf16.gmra.mxu0 %v198
    %v263 = vpop.f32.mrf.mxu0
    %v264 = vadd.f32 %v230, %v263
    %v265 = vpop.f32.mrf.mxu0
    %v266 = vadd.f32 %v230, %v265
    %267 = vdwg.mxu0
    %v268 = vld [vmem:[#allocation8] sm:$0xf]
    %v269 = vld [vmem:[#allocation8 + $0x4] sm:$0xf]
    %v270 = vld [vmem:[#allocation8 + $0x8] sm:$0xf]
    %v271 = vld [vmem:[#allocation8 + $0xc] sm:$0xf]
    %v272 = vld [vmem:[%s7] sm:$0x1]
    %v274 = vperm.slane %v272, 0
    %v280 = vunpack.c.l.b16 %v268
    %v281 = vunpack.c.l.b16 %v269
    %v282 = vunpack.c.l.b16 %v270
    %v283 = vunpack.c.l.b16 %v271
    %v284 = vpack.c.b16 %v281, %v280
    %v285 = vpack.c.b16 %v283, %v282
    %288 = vmatpush.bf16.msra.mxu0 0
    %289 = vmatpush.bf16.msra.mxu0 0
    %290 = vmatpush.bf16.msra.mxu0 0
    %291 = vmatpush.bf16.msra.mxu0 0
    %292 = vmatpush.bf16.msra.mxu0 0
    %293 = vmatpush.bf16.msra.mxu0 0
    %294 = vmatpush.bf16.msra.mxu0 %v285
    %295 = vmatpush.bf16.msra.mxu0 %v284
    %296 = vmatmul.bf16.gmra.mxu0 %v192
    %v297 = vpop.f32.mrf.mxu0
    %v298 = vadd.f32 %v274, %v297
    %v299 = vpop.f32.mrf.mxu0
    %v300 = vadd.f32 %v274, %v299
    %301 = vmatmul.bf16.gmra.mxu0 %v195
    %v302 = vpop.f32.mrf.mxu0
    %v303 = vadd.f32 %v274, %v302
    %v304 = vpop.f32.mrf.mxu0
    %v305 = vadd.f32 %v274, %v304
    %306 = vmatmul.bf16.gmra.mxu0 %v198
    %v307 = vpop.f32.mrf.mxu0
    %v308 = vadd.f32 %v274, %v307
    %v309 = vpop.f32.mrf.mxu0
    %v310 = vadd.f32 %v274, %v309
    %311 = vdwg.mxu0
    %v312 = vld [vmem:[%s8] sm:$0xff]
    %v313 = vld [vmem:[%s8 + $0x8] sm:$0xff]
    %v314 = vld [vmem:[%s8 + $0x10] sm:$0xff]
    %v315 = vld [vmem:[%s8 + $0x18] sm:$0xff]
    %v316 = vld [vmem:[#allocation9] sm:$0xff]
    %v317 = vld [vmem:[#allocation9 + $0x8] sm:$0xff]
    %v318 = vld [vmem:[#allocation9 + $0x10] sm:$0xff]
    %v319 = vld [vmem:[#allocation9 + $0x18] sm:$0xff]
    %v320 = vld [vmem:[#allocation11] sm:$0xff]
    %v321 = vld [vmem:[#allocation11 + $0x8] sm:$0xff]
    %v322 = vld [vmem:[#allocation11 + $0x10] sm:$0xff]
    %v323 = vld [vmem:[#allocation11 + $0x18] sm:$0xff]
    %v324 = vld [vmem:[%s11] sm:$0x1]
    %v325 = vld [vmem:[%s12] sm:$0x1]
    %v326 = vld [vmem:[%s13] sm:$0x1]
    %v327 = vld [vmem:[%s1] sm:$0xff]
    %v329 = vperm.slane %v324, 0
    %v332 = vsel %vm190, %v327, 0
    %334 = vmatpush.msra.mxu0 0.0
    %335 = vmatpush.msra.mxu0 0.0
    %336 = vmatpush.msra.mxu0 0.0
    %337 = vmatpush.msra.mxu0 0.0
    %338 = vmatpush.msra.mxu0 0.0
    %339 = vmatpush.msra.mxu0 0.0
    %340 = vmatpush.msra.mxu0 0.0
    %341 = vmatpush.msra.mxu0 0.0
    %342 = vmatpush.msra.mxu0 0.0
    %343 = vmatpush.msra.mxu0 0.0
    %344 = vmatpush.msra.mxu0 0.0
    %345 = vmatpush.msra.mxu0 0.0
    %346 = vmatpush.msra.mxu0 %v315
    %347 = vmatpush.msra.mxu0 %v314
    %348 = vmatpush.msra.mxu0 %v313
    %349 = vmatpush.msra.mxu0 %v312
    %350 = vmatmul.f32.gmra.mxu0 %v332
    %v351 = vpop.f32.mrf.mxu0
    %v352 = vadd.f32 %v329, %v351
    %353 = vdwg.mxu0
    %v355 = vperm.slane %v325, 0
    %357 = vmatpush.msra.mxu0 0.0
    %358 = vmatpush.msra.mxu0 0.0
    %359 = vmatpush.msra.mxu0 0.0
    %360 = vmatpush.msra.mxu0 0.0
    %361 = vmatpush.msra.mxu0 0.0
    %362 = vmatpush.msra.mxu0 0.0
    %363 = vmatpush.msra.mxu0 0.0
    %364 = vmatpush.msra.mxu0 0.0
    %365 = vmatpush.msra.mxu0 0.0
    %366 = vmatpush.msra.mxu0 0.0
    %367 = vmatpush.msra.mxu0 0.0
    %368 = vmatpush.msra.mxu0 0.0
    %369 = vmatpush.msra.mxu0 %v319
    %370 = vmatpush.msra.mxu0 %v318
    %371 = vmatpush.msra.mxu0 %v317
    %372 = vmatpush.msra.mxu0 %v316
    %373 = vmatmul.f32.gmra.mxu0 %v332
    %v374 = vpop.f32.mrf.mxu0
    %v375 = vadd.f32 %v355, %v374
    %376 = vdwg.mxu0
    %v378 = vperm.slane %v326, 0
    %380 = vmatpush.msra.mxu0 0.0
    %381 = vmatpush.msra.mxu0 0.0
    %382 = vmatpush.msra.mxu0 0.0
    %383 = vmatpush.msra.mxu0 0.0
    %384 = vmatpush.msra.mxu0 0.0
    %385 = vmatpush.msra.mxu0 0.0
    %386 = vmatpush.msra.mxu0 0.0
    %387 = vmatpush.msra.mxu0 0.0
    %388 = vmatpush.msra.mxu0 0.0
    %389 = vmatpush.msra.mxu0 0.0
    %390 = vmatpush.msra.mxu0 0.0
    %391 = vmatpush.msra.mxu0 0.0
    %392 = vmatpush.msra.mxu0 %v323
    %393 = vmatpush.msra.mxu0 %v322
    %394 = vmatpush.msra.mxu0 %v321
    %395 = vmatpush.msra.mxu0 %v320
    %396 = vmatmul.f32.gmra.mxu0 %v332
    %v397 = vpop.f32.mrf.mxu0
    %v398 = vadd.f32 %v378, %v397
    %399 = vdwg.mxu0
    %v400 = vadd.f32 %v210, %v352
    %v401 = vxor.u32 %v400, 2147483648
    %v402 = vmul.f32 %v401, 1.442695
    %v403 = vpow.pop %v402
    %v404 = vadd.f32 %v403, 1.0
    %v405 = vrcp.pop %v404
    %v406 = vmul.f32 %v404, %v405
    %v407 = vsub.f32 1.0, %v406
    %v408 = vmul.f32 %v405, %v407
    %v409 = vadd.f32 %v405, %v408
    %vm410 = vweird.f32 %v404
    %vm411 = vweird.f32 %v405
    %vm412 = vmor %vm410, %vm411
    %v413 = vsel %vm412, %v405, %v409
    %v414 = vand.u32 2147483647, %v404
    %vm415 = vcmp.eq.f32.partialorder %v414, 8.507059e+37
    %v416 = vand.u32 %v404, 2147483648
    %v417 = vor.u32 1.1754944e-38, %v416
    %v418 = vsel %vm415, %v417, %v413
    %v419 = vmul.f32 1.0, %v418
    %v420 = vadd.f32 %v254, %v375
    %v421 = vxor.u32 %v420, 2147483648
    %v422 = vmul.f32 %v421, 1.442695
    %v423 = vpow.pop %v422
    %v424 = vadd.f32 %v423, 1.0
    %v425 = vrcp.pop %v424
    %v426 = vmul.f32 %v424, %v425
    %v427 = vsub.f32 1.0, %v426
    %v428 = vmul.f32 %v425, %v427
    %v429 = vadd.f32 %v425, %v428
    %vm430 = vweird.f32 %v424
    %vm431 = vweird.f32 %v425
    %vm432 = vmor %vm430, %vm431
    %v433 = vsel %vm432, %v425, %v429
    %v434 = vand.u32 2147483647, %v424
    %vm435 = vcmp.eq.f32.partialorder %v434, 8.507059e+37
    %v436 = vand.u32 %v424, 2147483648
    %v437 = vor.u32 1.1754944e-38, %v436
    %v438 = vsel %vm435, %v437, %v433
    %v439 = vmul.f32 1.0, %v438
    %v440 = vmul.f32 %v419, %v398
    %v441 = vadd.f32 %v298, %v440
    %v442 = vtanh.pop %v441
    %v443 = vsub.f32 1.0, %v439
    %v444 = vmul.f32 %v443, %v442
    %v445 = vmul.f32 %v439, %v327
    %v446 = vadd.f32 %v444, %v445
    %447 = vst.msk [vmem:[#allocation2] sm:$0xff] %vm190, %v446
    %v449 = vsel %vm190, %v446, 0
    %451 = vmatpush.msra.mxu0 0.0
    %452 = vmatpush.msra.mxu0 0.0
    %453 = vmatpush.msra.mxu0 0.0
    %454 = vmatpush.msra.mxu0 0.0
    %455 = vmatpush.msra.mxu0 0.0
    %456 = vmatpush.msra.mxu0 0.0
    %457 = vmatpush.msra.mxu0 0.0
    %458 = vmatpush.msra.mxu0 0.0
    %459 = vmatpush.msra.mxu0 0.0
    %460 = vmatpush.msra.mxu0 0.0
    %461 = vmatpush.msra.mxu0 0.0
    %462 = vmatpush.msra.mxu0 0.0
    %463 = vmatpush.msra.mxu0 %v315
    %464 = vmatpush.msra.mxu0 %v314
    %465 = vmatpush.msra.mxu0 %v313
    %466 = vmatpush.msra.mxu0 %v312
    %467 = vmatmul.f32.gmra.mxu0 %v449
    %v468 = vpop.f32.mrf.mxu0
    %v469 = vadd.f32 %v329, %v468
    %470 = vdwg.mxu0
    %471 = vmatpush.msra.mxu0 0.0
    %472 = vmatpush.msra.mxu0 0.0
    %473 = vmatpush.msra.mxu0 0.0
    %474 = vmatpush.msra.mxu0 0.0
    %475 = vmatpush.msra.mxu0 0.0
    %476 = vmatpush.msra.mxu0 0.0
    %477 = vmatpush.msra.mxu0 0.0
    %478 = vmatpush.msra.mxu0 0.0
    %479 = vmatpush.msra.mxu0 0.0
    %480 = vmatpush.msra.mxu0 0.0
    %481 = vmatpush.msra.mxu0 0.0
    %482 = vmatpush.msra.mxu0 0.0
    %483 = vmatpush.msra.mxu0 %v319
    %484 = vmatpush.msra.mxu0 %v318
    %485 = vmatpush.msra.mxu0 %v317
    %486 = vmatpush.msra.mxu0 %v316
    %487 = vmatmul.f32.gmra.mxu0 %v449
    %v488 = vpop.f32.mrf.mxu0
    %v489 = vadd.f32 %v355, %v488
    %490 = vdwg.mxu0
    %491 = vmatpush.msra.mxu0 0.0
    %492 = vmatpush.msra.mxu0 0.0
    %493 = vmatpush.msra.mxu0 0.0
    %494 = vmatpush.msra.mxu0 0.0
    %495 = vmatpush.msra.mxu0 0.0
    %496 = vmatpush.msra.mxu0 0.0
    %497 = vmatpush.msra.mxu0 0.0
    %498 = vmatpush.msra.mxu0 0.0
    %499 = vmatpush.msra.mxu0 0.0
    %500 = vmatpush.msra.mxu0 0.0
    %501 = vmatpush.msra.mxu0 0.0
    %502 = vmatpush.msra.mxu0 0.0
    %503 = vmatpush.msra.mxu0 %v323
    %504 = vmatpush.msra.mxu0 %v322
    %505 = vmatpush.msra.mxu0 %v321
    %506 = vmatpush.msra.mxu0 %v320
    %507 = vmatmul.f32.gmra.mxu0 %v449
    %v508 = vpop.f32.mrf.mxu0
    %v509 = vadd.f32 %v378, %v508
    %510 = vdwg.mxu0
    %v511 = vadd.f32 %v212, %v469
    %v512 = vxor.u32 %v511, 2147483648
    %v513 = vmul.f32 %v512, 1.442695
    %v514 = vpow.pop %v513
    %v515 = vadd.f32 %v514, 1.0
    %v516 = vrcp.pop %v515
    %v517 = vmul.f32 %v515, %v516
    %v518 = vsub.f32 1.0, %v517
    %v519 = vmul.f32 %v516, %v518
    %v520 = vadd.f32 %v516, %v519
    %vm521 = vweird.f32 %v515
    %vm522 = vweird.f32 %v516
    %vm523 = vmor %vm521, %vm522
    %v524 = vsel %vm523, %v516, %v520
    %v525 = vand.u32 2147483647, %v515
    %vm526 = vcmp.eq.f32.partialorder %v525, 8.507059e+37
    %v527 = vand.u32 %v515, 2147483648
    %v528 = vor.u32 1.1754944e-38, %v527
    %v529 = vsel %vm526, %v528, %v524
    %v530 = vmul.f32 1.0, %v529
    %v531 = vadd.f32 %v256, %v489
    %v532 = vxor.u32 %v531, 2147483648
    %v533 = vmul.f32 %v532, 1.442695
    %v534 = vpow.pop %v533
    %v535 = vadd.f32 %v534, 1.0
    %v536 = vrcp.pop %v535
    %v537 = vmul.f32 %v535, %v536
    %v538 = vsub.f32 1.0, %v537
    %v539 = vmul.f32 %v536, %v538
    %v540 = vadd.f32 %v536, %v539
    %vm541 = vweird.f32 %v535
    %vm542 = vweird.f32 %v536
    %vm543 = vmor %vm541, %vm542
    %v544 = vsel %vm543, %v536, %v540
    %v545 = vand.u32 2147483647, %v535
    %vm546 = vcmp.eq.f32.partialorder %v545, 8.507059e+37
    %v547 = vand.u32 %v535, 2147483648
    %v548 = vor.u32 1.1754944e-38, %v547
    %v549 = vsel %vm546, %v548, %v544
    %v550 = vmul.f32 1.0, %v549
    %v551 = vmul.f32 %v530, %v509
    %v552 = vadd.f32 %v300, %v551
    %v553 = vtanh.pop %v552
    %v554 = vsub.f32 1.0, %v550
    %v555 = vmul.f32 %v554, %v553
    %v556 = vmul.f32 %v550, %v446
    %v557 = vadd.f32 %v555, %v556
    %558 = vst.msk [vmem:[#allocation2 + $0x8] sm:$0xff] %vm190, %v557
    %v560 = vsel %vm190, %v557, 0
    %562 = vmatpush.msra.mxu0 0.0
    %563 = vmatpush.msra.mxu0 0.0
    %564 = vmatpush.msra.mxu0 0.0
    %565 = vmatpush.msra.mxu0 0.0
    %566 = vmatpush.msra.mxu0 0.0
    %567 = vmatpush.msra.mxu0 0.0
    %568 = vmatpush.msra.mxu0 0.0
    %569 = vmatpush.msra.mxu0 0.0
    %570 = vmatpush.msra.mxu0 0.0
    %571 = vmatpush.msra.mxu0 0.0
    %572 = vmatpush.msra.mxu0 0.0
    %573 = vmatpush.msra.mxu0 0.0
    %574 = vmatpush.msra.mxu0 %v315
    %575 = vmatpush.msra.mxu0 %v314
    %576 = vmatpush.msra.mxu0 %v313
    %577 = vmatpush.msra.mxu0 %v312
    %578 = vmatmul.f32.gmra.mxu0 %v560
    %v579 = vpop.f32.mrf.mxu0
    %v580 = vadd.f32 %v329, %v579
    %581 = vdwg.mxu0
    %582 = vmatpush.msra.mxu0 0.0
    %583 = vmatpush.msra.mxu0 0.0
    %584 = vmatpush.msra.mxu0 0.0
    %585 = vmatpush.msra.mxu0 0.0
    %586 = vmatpush.msra.mxu0 0.0
    %587 = vmatpush.msra.mxu0 0.0
    %588 = vmatpush.msra.mxu0 0.0
    %589 = vmatpush.msra.mxu0 0.0
    %590 = vmatpush.msra.mxu0 0.0
    %591 = vmatpush.msra.mxu0 0.0
    %592 = vmatpush.msra.mxu0 0.0
    %593 = vmatpush.msra.mxu0 0.0
    %594 = vmatpush.msra.mxu0 %v319
    %595 = vmatpush.msra.mxu0 %v318
    %596 = vmatpush.msra.mxu0 %v317
    %597 = vmatpush.msra.mxu0 %v316
    %598 = vmatmul.f32.gmra.mxu0 %v560
    %v599 = vpop.f32.mrf.mxu0
    %v600 = vadd.f32 %v355, %v599
    %601 = vdwg.mxu0
    %602 = vmatpush.msra.mxu0 0.0
    %603 = vmatpush.msra.mxu0 0.0
    %604 = vmatpush.msra.mxu0 0.0
    %605 = vmatpush.msra.mxu0 0.0
    %606 = vmatpush.msra.mxu0 0.0
    %607 = vmatpush.msra.mxu0 0.0
    %608 = vmatpush.msra.mxu0 0.0
    %609 = vmatpush.msra.mxu0 0.0
    %610 = vmatpush.msra.mxu0 0.0
    %611 = vmatpush.msra.mxu0 0.0
    %612 = vmatpush.msra.mxu0 0.0
    %613 = vmatpush.msra.mxu0 0.0
    %614 = vmatpush.msra.mxu0 %v323
    %615 = vmatpush.msra.mxu0 %v322
    %616 = vmatpush.msra.mxu0 %v321
    %617 = vmatpush.msra.mxu0 %v320
    %618 = vmatmul.f32.gmra.mxu0 %v560
    %v619 = vpop.f32.mrf.mxu0
    %v620 = vadd.f32 %v378, %v619
    %621 = vdwg.mxu0
    %v622 = vadd.f32 %v215, %v580
    %v623 = vxor.u32 %v622, 2147483648
    %v624 = vmul.f32 %v623, 1.442695
    %v625 = vpow.pop %v624
    %v626 = vadd.f32 %v625, 1.0
    %v627 = vrcp.pop %v626
    %v628 = vmul.f32 %v626, %v627
    %v629 = vsub.f32 1.0, %v628
    %v630 = vmul.f32 %v627, %v629
    %v631 = vadd.f32 %v627, %v630
    %vm632 = vweird.f32 %v626
    %vm633 = vweird.f32 %v627
    %vm634 = vmor %vm632, %vm633
    %v635 = vsel %vm634, %v627, %v631
    %v636 = vand.u32 2147483647, %v626
    %vm637 = vcmp.eq.f32.partialorder %v636, 8.507059e+37
    %v638 = vand.u32 %v626, 2147483648
    %v639 = vor.u32 1.1754944e-38, %v638
    %v640 = vsel %vm637, %v639, %v635
    %v641 = vmul.f32 1.0, %v640
    %v642 = vadd.f32 %v259, %v600
    %v643 = vxor.u32 %v642, 2147483648
    %v644 = vmul.f32 %v643, 1.442695
    %v645 = vpow.pop %v644
    %v646 = vadd.f32 %v645, 1.0
    %v647 = vrcp.pop %v646
    %v648 = vmul.f32 %v646, %v647
    %v649 = vsub.f32 1.0, %v648
    %v650 = vmul.f32 %v647, %v649
    %v651 = vadd.f32 %v647, %v650
    %vm652 = vweird.f32 %v646
    %vm653 = vweird.f32 %v647
    %vm654 = vmor %vm652, %vm653
    %v655 = vsel %vm654, %v647, %v651
    %v656 = vand.u32 2147483647, %v646
    %vm657 = vcmp.eq.f32.partialorder %v656, 8.507059e+37
    %v658 = vand.u32 %v646, 2147483648
    %v659 = vor.u32 1.1754944e-38, %v658
    %v660 = vsel %vm657, %v659, %v655
    %v661 = vmul.f32 1.0, %v660
    %v662 = vmul.f32 %v641, %v620
    %v663 = vadd.f32 %v303, %v662
    %v664 = vtanh.pop %v663
    %v665 = vsub.f32 1.0, %v661
    %v666 = vmul.f32 %v665, %v664
    %v667 = vmul.f32 %v661, %v557
    %v668 = vadd.f32 %v666, %v667
    %669 = vst.msk [vmem:[#allocation2 + $0x10] sm:$0xff] %vm190, %v668
    %v671 = vsel %vm190, %v668, 0
    %673 = vmatpush.msra.mxu0 0.0
    %674 = vmatpush.msra.mxu0 0.0
    %675 = vmatpush.msra.mxu0 0.0
    %676 = vmatpush.msra.mxu0 0.0
    %677 = vmatpush.msra.mxu0 0.0
    %678 = vmatpush.msra.mxu0 0.0
    %679 = vmatpush.msra.mxu0 0.0
    %680 = vmatpush.msra.mxu0 0.0
    %681 = vmatpush.msra.mxu0 0.0
    %682 = vmatpush.msra.mxu0 0.0
    %683 = vmatpush.msra.mxu0 0.0
    %684 = vmatpush.msra.mxu0 0.0
    %685 = vmatpush.msra.mxu0 %v315
    %686 = vmatpush.msra.mxu0 %v314
    %687 = vmatpush.msra.mxu0 %v313
    %688 = vmatpush.msra.mxu0 %v312
    %689 = vmatmul.f32.gmra.mxu0 %v671
    %v690 = vpop.f32.mrf.mxu0
    %v691 = vadd.f32 %v329, %v690
    %692 = vdwg.mxu0
    %693 = vmatpush.msra.mxu0 0.0
    %694 = vmatpush.msra.mxu0 0.0
    %695 = vmatpush.msra.mxu0 0.0
    %696 = vmatpush.msra.mxu0 0.0
    %697 = vmatpush.msra.mxu0 0.0
    %698 = vmatpush.msra.mxu0 0.0
    %699 = vmatpush.msra.mxu0 0.0
    %700 = vmatpush.msra.mxu0 0.0
    %701 = vmatpush.msra.mxu0 0.0
    %702 = vmatpush.msra.mxu0 0.0
    %703 = vmatpush.msra.mxu0 0.0
    %704 = vmatpush.msra.mxu0 0.0
    %705 = vmatpush.msra.mxu0 %v319
    %706 = vmatpush.msra.mxu0 %v318
    %707 = vmatpush.msra.mxu0 %v317
    %708 = vmatpush.msra.mxu0 %v316
    %709 = vmatmul.f32.gmra.mxu0 %v671
    %v710 = vpop.f32.mrf.mxu0
    %v711 = vadd.f32 %v355, %v710
    %712 = vdwg.mxu0
    %713 = vmatpush.msra.mxu0 0.0
    %714 = vmatpush.msra.mxu0 0.0
    %715 = vmatpush.msra.mxu0 0.0
    %716 = vmatpush.msra.mxu0 0.0
    %717 = vmatpush.msra.mxu0 0.0
    %718 = vmatpush.msra.mxu0 0.0
    %719 = vmatpush.msra.mxu0 0.0
    %720 = vmatpush.msra.mxu0 0.0
    %721 = vmatpush.msra.mxu0 0.0
    %722 = vmatpush.msra.mxu0 0.0
    %723 = vmatpush.msra.mxu0 0.0
    %724 = vmatpush.msra.mxu0 0.0
    %725 = vmatpush.msra.mxu0 %v323
    %726 = vmatpush.msra.mxu0 %v322
    %727 = vmatpush.msra.mxu0 %v321
    %728 = vmatpush.msra.mxu0 %v320
    %729 = vmatmul.f32.gmra.mxu0 %v671
    %v730 = vpop.f32.mrf.mxu0
    %v731 = vadd.f32 %v378, %v730
    %732 = vdwg.mxu0
    %v733 = vadd.f32 %v217, %v691
    %v734 = vxor.u32 %v733, 2147483648
    %v735 = vmul.f32 %v734, 1.442695
    %v736 = vpow.pop %v735
    %v737 = vadd.f32 %v736, 1.0
    %v738 = vrcp.pop %v737
    %v739 = vmul.f32 %v737, %v738
    %v740 = vsub.f32 1.0, %v739
    %v741 = vmul.f32 %v738, %v740
    %v742 = vadd.f32 %v738, %v741
    %vm743 = vweird.f32 %v737
    %vm744 = vweird.f32 %v738
    %vm745 = vmor %vm743, %vm744
    %v746 = vsel %vm745, %v738, %v742
    %v747 = vand.u32 2147483647, %v737
    %vm748 = vcmp.eq.f32.partialorder %v747, 8.507059e+37
    %v749 = vand.u32 %v737, 2147483648
    %v750 = vor.u32 1.1754944e-38, %v749
    %v751 = vsel %vm748, %v750, %v746
    %v752 = vmul.f32 1.0, %v751
    %v753 = vadd.f32 %v261, %v711
    %v754 = vxor.u32 %v753, 2147483648
    %v755 = vmul.f32 %v754, 1.442695
    %v756 = vpow.pop %v755
    %v757 = vadd.f32 %v756, 1.0
    %v758 = vrcp.pop %v757
    %v759 = vmul.f32 %v757, %v758
    %v760 = vsub.f32 1.0, %v759
    %v761 = vmul.f32 %v758, %v760
    %v762 = vadd.f32 %v758, %v761
    %vm763 = vweird.f32 %v757
    %vm764 = vweird.f32 %v758
    %vm765 = vmor %vm763, %vm764
    %v766 = vsel %vm765, %v758, %v762
    %v767 = vand.u32 2147483647, %v757
    %vm768 = vcmp.eq.f32.partialorder %v767, 8.507059e+37
    %v769 = vand.u32 %v757, 2147483648
    %v770 = vor.u32 1.1754944e-38, %v769
    %v771 = vsel %vm768, %v770, %v766
    %v772 = vmul.f32 1.0, %v771
    %v773 = vmul.f32 %v752, %v731
    %v774 = vadd.f32 %v305, %v773
    %v775 = vtanh.pop %v774
    %v776 = vsub.f32 1.0, %v772
    %v777 = vmul.f32 %v776, %v775
    %v778 = vmul.f32 %v772, %v668
    %v779 = vadd.f32 %v777, %v778
    %780 = vst.msk [vmem:[#allocation2 + $0x18] sm:$0xff] %vm190, %v779
    %v782 = vsel %vm190, %v779, 0
    %784 = vmatpush.msra.mxu0 0.0
    %785 = vmatpush.msra.mxu0 0.0
    %786 = vmatpush.msra.mxu0 0.0
    %787 = vmatpush.msra.mxu0 0.0
    %788 = vmatpush.msra.mxu0 0.0
    %789 = vmatpush.msra.mxu0 0.0
    %790 = vmatpush.msra.mxu0 0.0
    %791 = vmatpush.msra.mxu0 0.0
    %792 = vmatpush.msra.mxu0 0.0
    %793 = vmatpush.msra.mxu0 0.0
    %794 = vmatpush.msra.mxu0 0.0
    %795 = vmatpush.msra.mxu0 0.0
    %796 = vmatpush.msra.mxu0 %v315
    %797 = vmatpush.msra.mxu0 %v314
    %798 = vmatpush.msra.mxu0 %v313
    %799 = vmatpush.msra.mxu0 %v312
    %800 = vmatmul.f32.gmra.mxu0 %v782
    %v801 = vpop.f32.mrf.mxu0
    %v802 = vadd.f32 %v329, %v801
    %803 = vdwg.mxu0
    %804 = vmatpush.msra.mxu0 0.0
    %805 = vmatpush.msra.mxu0 0.0
    %806 = vmatpush.msra.mxu0 0.0
    %807 = vmatpush.msra.mxu0 0.0
    %808 = vmatpush.msra.mxu0 0.0
    %809 = vmatpush.msra.mxu0 0.0
    %810 = vmatpush.msra.mxu0 0.0
    %811 = vmatpush.msra.mxu0 0.0
    %812 = vmatpush.msra.mxu0 0.0
    %813 = vmatpush.msra.mxu0 0.0
    %814 = vmatpush.msra.mxu0 0.0
    %815 = vmatpush.msra.mxu0 0.0
    %816 = vmatpush.msra.mxu0 %v319
    %817 = vmatpush.msra.mxu0 %v318
    %818 = vmatpush.msra.mxu0 %v317
    %819 = vmatpush.msra.mxu0 %v316
    %820 = vmatmul.f32.gmra.mxu0 %v782
    %v821 = vpop.f32.mrf.mxu0
    %v822 = vadd.f32 %v355, %v821
    %823 = vdwg.mxu0
    %824 = vmatpush.msra.mxu0 0.0
    %825 = vmatpush.msra.mxu0 0.0
    %826 = vmatpush.msra.mxu0 0.0
    %827 = vmatpush.msra.mxu0 0.0
    %828 = vmatpush.msra.mxu0 0.0
    %829 = vmatpush.msra.mxu0 0.0
    %830 = vmatpush.msra.mxu0 0.0
    %831 = vmatpush.msra.mxu0 0.0
    %832 = vmatpush.msra.mxu0 0.0
    %833 = vmatpush.msra.mxu0 0.0
    %834 = vmatpush.msra.mxu0 0.0
    %835 = vmatpush.msra.mxu0 0.0
    %836 = vmatpush.msra.mxu0 %v323
    %837 = vmatpush.msra.mxu0 %v322
    %838 = vmatpush.msra.mxu0 %v321
    %839 = vmatpush.msra.mxu0 %v320
    %840 = vmatmul.f32.gmra.mxu0 %v782
    %v841 = vpop.f32.mrf.mxu0
    %v842 = vadd.f32 %v378, %v841
    %843 = vdwg.mxu0
    %v844 = vadd.f32 %v220, %v802
    %v845 = vxor.u32 %v844, 2147483648
    %v846 = vmul.f32 %v845, 1.442695
    %v847 = vpow.pop %v846
    %v848 = vadd.f32 %v847, 1.0
    %v849 = vrcp.pop %v848
    %v850 = vmul.f32 %v848, %v849
    %v851 = vsub.f32 1.0, %v850
    %v852 = vmul.f32 %v849, %v851
    %v853 = vadd.f32 %v849, %v852
    %vm854 = vweird.f32 %v848
    %vm855 = vweird.f32 %v849
    %vm856 = vmor %vm854, %vm855
    %v857 = vsel %vm856, %v849, %v853
    %v858 = vand.u32 2147483647, %v848
    %vm859 = vcmp.eq.f32.partialorder %v858, 8.507059e+37
    %v860 = vand.u32 %v848, 2147483648
    %v861 = vor.u32 1.1754944e-38, %v860
    %v862 = vsel %vm859, %v861, %v857
    %v863 = vmul.f32 1.0, %v862
    %v864 = vadd.f32 %v264, %v822
    %v865 = vxor.u32 %v864, 2147483648
    %v866 = vmul.f32 %v865, 1.442695
    %v867 = vpow.pop %v866
    %v868 = vadd.f32 %v867, 1.0
    %v869 = vrcp.pop %v868
    %v870 = vmul.f32 %v868, %v869
    %v871 = vsub.f32 1.0, %v870
    %v872 = vmul.f32 %v869, %v871
    %v873 = vadd.f32 %v869, %v872
    %vm874 = vweird.f32 %v868
    %vm875 = vweird.f32 %v869
    %vm876 = vmor %vm874, %vm875
    %v877 = vsel %vm876, %v869, %v873
    %v878 = vand.u32 2147483647, %v868
    %vm879 = vcmp.eq.f32.partialorder %v878, 8.507059e+37
    %v880 = vand.u32 %v868, 2147483648
    %v881 = vor.u32 1.1754944e-38, %v880
    %v882 = vsel %vm879, %v881, %v877
    %v883 = vmul.f32 1.0, %v882
    %v884 = vmul.f32 %v863, %v842
    %v885 = vadd.f32 %v308, %v884
    %v886 = vtanh.pop %v885
    %v887 = vsub.f32 1.0, %v883
    %v888 = vmul.f32 %v887, %v886
    %v889 = vmul.f32 %v883, %v779
    %v890 = vadd.f32 %v888, %v889
    %891 = vst.msk [vmem:[#allocation2 + $0x20] sm:$0xff] %vm190, %v890
    %v893 = vsel %vm190, %v890, 0
    %895 = vmatpush.msra.mxu0 0.0
    %896 = vmatpush.msra.mxu0 0.0
    %897 = vmatpush.msra.mxu0 0.0
    %898 = vmatpush.msra.mxu0 0.0
    %899 = vmatpush.msra.mxu0 0.0
    %900 = vmatpush.msra.mxu0 0.0
    %901 = vmatpush.msra.mxu0 0.0
    %902 = vmatpush.msra.mxu0 0.0
    %903 = vmatpush.msra.mxu0 0.0
    %904 = vmatpush.msra.mxu0 0.0
    %905 = vmatpush.msra.mxu0 0.0
    %906 = vmatpush.msra.mxu0 0.0
    %907 = vmatpush.msra.mxu0 %v315
    %908 = vmatpush.msra.mxu0 %v314
    %909 = vmatpush.msra.mxu0 %v313
    %910 = vmatpush.msra.mxu0 %v312
    %911 = vmatmul.f32.gmra.mxu0 %v893
    %v912 = vpop.f32.mrf.mxu0
    %v913 = vadd.f32 %v329, %v912
    %914 = vdwg.mxu0
    %915 = vmatpush.msra.mxu0 0.0
    %916 = vmatpush.msra.mxu0 0.0
    %917 = vmatpush.msra.mxu0 0.0
    %918 = vmatpush.msra.mxu0 0.0
    %919 = vmatpush.msra.mxu0 0.0
    %920 = vmatpush.msra.mxu0 0.0
    %921 = vmatpush.msra.mxu0 0.0
    %922 = vmatpush.msra.mxu0 0.0
    %923 = vmatpush.msra.mxu0 0.0
    %924 = vmatpush.msra.mxu0 0.0
    %925 = vmatpush.msra.mxu0 0.0
    %926 = vmatpush.msra.mxu0 0.0
    %927 = vmatpush.msra.mxu0 %v319
    %928 = vmatpush.msra.mxu0 %v318
    %929 = vmatpush.msra.mxu0 %v317
    %930 = vmatpush.msra.mxu0 %v316
    %931 = vmatmul.f32.gmra.mxu0 %v893
    %v932 = vpop.f32.mrf.mxu0
    %v933 = vadd.f32 %v355, %v932
    %934 = vdwg.mxu0
    %935 = vmatpush.msra.mxu0 0.0
    %936 = vmatpush.msra.mxu0 0.0
    %937 = vmatpush.msra.mxu0 0.0
    %938 = vmatpush.msra.mxu0 0.0
    %939 = vmatpush.msra.mxu0 0.0
    %940 = vmatpush.msra.mxu0 0.0
    %941 = vmatpush.msra.mxu0 0.0
    %942 = vmatpush.msra.mxu0 0.0
    %943 = vmatpush.msra.mxu0 0.0
    %944 = vmatpush.msra.mxu0 0.0
    %945 = vmatpush.msra.mxu0 0.0
    %946 = vmatpush.msra.mxu0 0.0
    %947 = vmatpush.msra.mxu0 %v323
    %948 = vmatpush.msra.mxu0 %v322
    %949 = vmatpush.msra.mxu0 %v321
    %950 = vmatpush.msra.mxu0 %v320
    %951 = vmatmul.f32.gmra.mxu0 %v893
    %v952 = vpop.f32.mrf.mxu0
    %v953 = vadd.f32 %v378, %v952
    %954 = vdwg.mxu0
    %v955 = vadd.f32 %v222, %v913
    %v956 = vxor.u32 %v955, 2147483648
    %v957 = vmul.f32 %v956, 1.442695
    %v958 = vpow.pop %v957
    %v959 = vadd.f32 %v958, 1.0
    %v960 = vrcp.pop %v959
    %v961 = vmul.f32 %v959, %v960
    %v962 = vsub.f32 1.0, %v961
    %v963 = vmul.f32 %v960, %v962
    %v964 = vadd.f32 %v960, %v963
    %vm965 = vweird.f32 %v959
    %vm966 = vweird.f32 %v960
    %vm967 = vmor %vm965, %vm966
    %v968 = vsel %vm967, %v960, %v964
    %v969 = vand.u32 2147483647, %v959
    %vm970 = vcmp.eq.f32.partialorder %v969, 8.507059e+37
    %v971 = vand.u32 %v959, 2147483648
    %v972 = vor.u32 1.1754944e-38, %v971
    %v973 = vsel %vm970, %v972, %v968
    %v974 = vmul.f32 1.0, %v973
    %v975 = vadd.f32 %v266, %v933
    %v976 = vxor.u32 %v975, 2147483648
    %v977 = vmul.f32 %v976, 1.442695
    %v978 = vpow.pop %v977
    %v979 = vadd.f32 %v978, 1.0
    %v980 = vrcp.pop %v979
    %v981 = vmul.f32 %v979, %v980
    %v982 = vsub.f32 1.0, %v981
    %v983 = vmul.f32 %v980, %v982
    %v984 = vadd.f32 %v980, %v983
    %vm985 = vweird.f32 %v979
    %vm986 = vweird.f32 %v980
    %vm987 = vmor %vm985, %vm986
    %v988 = vsel %vm987, %v980, %v984
    %v989 = vand.u32 2147483647, %v979
    %vm990 = vcmp.eq.f32.partialorder %v989, 8.507059e+37
    %v991 = vand.u32 %v979, 2147483648
    %v992 = vor.u32 1.1754944e-38, %v991
    %v993 = vsel %vm990, %v992, %v988
    %v994 = vmul.f32 1.0, %v993
    %v995 = vmul.f32 %v974, %v953
    %v996 = vadd.f32 %v310, %v995
    %v997 = vtanh.pop %v996
    %v998 = vsub.f32 1.0, %v994
    %v999 = vmul.f32 %v998, %v997
    %v1000 = vmul.f32 %v994, %v890
    %v1001 = vadd.f32 %v999, %v1000
    %1002 = vst.msk [vmem:[#allocation2 + $0x28] sm:$0xff] %vm190, %v1001
    %v1003 = vld [vmem:[#allocation2] sm:$0xff]
    %v1004 = vld [vmem:[#allocation2 + $0x8] sm:$0xff]
    %v1005 = vld [vmem:[#allocation2 + $0x10] sm:$0xff]
    %v1006 = vld [vmem:[#allocation2 + $0x18] sm:$0xff]
    %v1007 = vld [vmem:[#allocation2 + $0x20] sm:$0xff]
    %v1008 = vld [vmem:[#allocation2 + $0x28] sm:$0xff]
    %v1009 = vpack.c.bf16 %v1004, %v1003
    %v1010 = vpack.c.bf16 %v1006, %v1005
    %v1011 = vpack.c.bf16 %v1008, %v1007
    %v1012 = vld [vmem:[#allocation12] sm:$0xff]
    %v1013 = vld [vmem:[#allocation12 + $0x8] sm:$0xff]
    %v1014 = vld [vmem:[#allocation12 + $0x10] sm:$0xff]
    %v1015 = vld [vmem:[#allocation12 + $0x18] sm:$0xff]
    %v1016 = vld [vmem:[%s15] sm:$0x3]
    %v1018 = vperm.slane %v1016, 0
    %v1019 = vperm.slane %v1016, 1
    %v1026 = vunpack.c.l.b16 %v1012
    %v1027 = vunpack.c.h.b16 %v1012
    %v1028 = vunpack.c.l.b16 %v1013
    %v1029 = vunpack.c.h.b16 %v1013
    %v1030 = vunpack.c.l.b16 %v1014
    %v1031 = vunpack.c.h.b16 %v1014
    %v1032 = vunpack.c.l.b16 %v1015
    %v1033 = vunpack.c.h.b16 %v1015
    %v1034 = vpack.c.b16 %v1028, %v1026
    %v1035 = vpack.c.b16 %v1029, %v1027
    %v1036 = vpack.c.b16 %v1032, %v1030
    %v1037 = vpack.c.b16 %v1033, %v1031
    %v1043 = vsel %vm190, %v1009, 0
    %v1046 = vsel %vm190, %v1010, 0
    %v1049 = vsel %vm190, %v1011, 0
    %1051 = vmatpush.bf16.msra.mxu0 0
    %1052 = vmatpush.bf16.msra.mxu0 0
    %1053 = vmatpush.bf16.msra.mxu0 0
    %1054 = vmatpush.bf16.msra.mxu0 0
    %1055 = vmatpush.bf16.msra.mxu0 0
    %1056 = vmatpush.bf16.msra.mxu0 0
    %1057 = vmatpush.bf16.msra.mxu0 %v1036
    %1058 = vmatpush.bf16.msra.mxu0 %v1034
    %1059 = vmatmul.bf16.gmra.mxu0 %v1043
    %v1060 = vpop.f32.mrf.mxu0
    %v1061 = vadd.f32 %v1018, %v1060
    %v1062 = vpop.f32.mrf.mxu0
    %v1063 = vadd.f32 %v1018, %v1062
    %1064 = vmatmul.bf16.gmra.mxu0 %v1046
    %v1065 = vpop.f32.mrf.mxu0
    %v1066 = vadd.f32 %v1018, %v1065
    %v1067 = vpop.f32.mrf.mxu0
    %v1068 = vadd.f32 %v1018, %v1067
    %1069 = vmatmul.bf16.gmra.mxu0 %v1049
    %v1070 = vpop.f32.mrf.mxu0
    %v1071 = vadd.f32 %v1018, %v1070
    %v1072 = vpop.f32.mrf.mxu0
    %v1073 = vadd.f32 %v1018, %v1072
    %1074 = vdwg.mxu0
    %1075 = vmatpush.bf16.msra.mxu0 0
    %1076 = vmatpush.bf16.msra.mxu0 0
    %1077 = vmatpush.bf16.msra.mxu0 0
    %1078 = vmatpush.bf16.msra.mxu0 0
    %1079 = vmatpush.bf16.msra.mxu0 0
    %1080 = vmatpush.bf16.msra.mxu0 0
    %1081 = vmatpush.bf16.msra.mxu0 %v1037
    %1082 = vmatpush.bf16.msra.mxu0 %v1035
    %1083 = vmatmul.bf16.gmra.mxu0 %v1043
    %v1084 = vpop.f32.mrf.mxu0
    %v1085 = vadd.f32 %v1019, %v1084
    %v1086 = vpop.f32.mrf.mxu0
    %v1087 = vadd.f32 %v1019, %v1086
    %1088 = vmatmul.bf16.gmra.mxu0 %v1046
    %v1089 = vpop.f32.mrf.mxu0
    %v1090 = vadd.f32 %v1019, %v1089
    %v1091 = vpop.f32.mrf.mxu0
    %v1092 = vadd.f32 %v1019, %v1091
    %1093 = vmatmul.bf16.gmra.mxu0 %v1049
    %v1094 = vpop.f32.mrf.mxu0
    %v1095 = vadd.f32 %v1019, %v1094
    %v1096 = vpop.f32.mrf.mxu0
    %v1097 = vadd.f32 %v1019, %v1096
    %1098 = vdwg.mxu0
    %v1099 = vmax.f32 %v1061, %v1085
    %1100 = vmax.xlane.f32.xlu0 %v1099
    %v1101 = vpop.xlane.xlu0 %1100
    %v1102 = vmax.f32 %v1063, %v1087
    %1103 = vmax.xlane.f32.xlu0 %v1102
    %v1104 = vpop.xlane.xlu0 %1103
    %v1105 = vmax.f32 %v1066, %v1090
    %1106 = vmax.xlane.f32.xlu0 %v1105
    %v1107 = vpop.xlane.xlu0 %1106
    %v1108 = vmax.f32 %v1068, %v1092
    %1109 = vmax.xlane.f32.xlu0 %v1108
    %v1110 = vpop.xlane.xlu0 %1109
    %v1111 = vmax.f32 %v1071, %v1095
    %1112 = vmax.xlane.f32.xlu0 %v1111
    %v1113 = vpop.xlane.xlu0 %1112
    %v1114 = vmax.f32 %v1073, %v1097
    %1115 = vmax.xlane.f32.xlu0 %v1114
    %v1116 = vpop.xlane.xlu0 %1115
    %v1117 = vsub.f32 %v1061, %v1101
    %v1118 = vsub.f32 %v1085, %v1101
    %v1119 = vsub.f32 %v1063, %v1104
    %v1120 = vsub.f32 %v1087, %v1104
    %v1121 = vsub.f32 %v1066, %v1107
    %v1122 = vsub.f32 %v1090, %v1107
    %v1123 = vsub.f32 %v1068, %v1110
    %v1124 = vsub.f32 %v1092, %v1110
    %v1125 = vsub.f32 %v1071, %v1113
    %v1126 = vsub.f32 %v1095, %v1113
    %v1127 = vsub.f32 %v1073, %v1116
    %v1128 = vsub.f32 %v1097, %v1116
    %v1129 = vmul.f32 %v1117, 1.442695
    %v1130 = vpow.pop %v1129
    %v1131 = vmul.f32 %v1118, 1.442695
    %v1132 = vpow.pop %v1131
    %v1133 = vmul.f32 %v1119, 1.442695
    %v1134 = vpow.pop %v1133
    %v1135 = vmul.f32 %v1120, 1.442695
    %v1136 = vpow.pop %v1135
    %v1137 = vmul.f32 %v1121, 1.442695
    %v1138 = vpow.pop %v1137
    %v1139 = vmul.f32 %v1122, 1.442695
    %v1140 = vpow.pop %v1139
    %v1141 = vmul.f32 %v1123, 1.442695
    %v1142 = vpow.pop %v1141
    %v1143 = vmul.f32 %v1124, 1.442695
    %v1144 = vpow.pop %v1143
    %v1145 = vmul.f32 %v1125, 1.442695
    %v1146 = vpow.pop %v1145
    %v1147 = vmul.f32 %v1126, 1.442695
    %v1148 = vpow.pop %v1147
    %v1149 = vmul.f32 %v1127, 1.442695
    %v1150 = vpow.pop %v1149
    %v1151 = vmul.f32 %v1128, 1.442695
    %v1152 = vpow.pop %v1151
    %v1153 = vadd.f32 %v1130, %v1132
    %1154 = vadd.xlane.f32.xlu0 %v1153
    %v1155 = vpop.xlane.xlu0 %1154
    %v1156 = vadd.f32 %v1134, %v1136
    %1157 = vadd.xlane.f32.xlu0 %v1156
    %v1158 = vpop.xlane.xlu0 %1157
    %v1159 = vadd.f32 %v1138, %v1140
    %1160 = vadd.xlane.f32.xlu0 %v1159
    %v1161 = vpop.xlane.xlu0 %1160
    %v1162 = vadd.f32 %v1142, %v1144
    %1163 = vadd.xlane.f32.xlu0 %v1162
    %v1164 = vpop.xlane.xlu0 %1163
    %v1165 = vadd.f32 %v1146, %v1148
    %1166 = vadd.xlane.f32.xlu0 %v1165
    %v1167 = vpop.xlane.xlu0 %1166
    %v1168 = vadd.f32 %v1150, %v1152
    %1169 = vadd.xlane.f32.xlu0 %v1168
    %v1170 = vpop.xlane.xlu0 %1169
    %v1171 = vlog2.pop %v1155
    %v1172 = vmul.f32 %v1171, 0.6931472
    %v1173 = vlog2.pop %v1158
    %v1174 = vmul.f32 %v1173, 0.6931472
    %v1175 = vlog2.pop %v1161
    %v1176 = vmul.f32 %v1175, 0.6931472
    %v1177 = vlog2.pop %v1164
    %v1178 = vmul.f32 %v1177, 0.6931472
    %v1179 = vlog2.pop %v1167
    %v1180 = vmul.f32 %v1179, 0.6931472
    %v1181 = vlog2.pop %v1170
    %v1182 = vmul.f32 %v1181, 0.6931472
    %v1183 = vadd.f32 %v1172, %v1101
    %v1184 = vadd.f32 %v1174, %v1104
    %v1185 = vadd.f32 %v1176, %v1107
    %v1186 = vadd.f32 %v1178, %v1110
    %v1187 = vadd.f32 %v1180, %v1113
    %v1188 = vadd.f32 %v1182, %v1116
    %v1189 = vsub.f32 %v1061, %v1183
    %v1190 = vsub.f32 %v1085, %v1183
    %v1191 = vsub.f32 %v1063, %v1184
    %v1192 = vsub.f32 %v1087, %v1184
    %v1193 = vsub.f32 %v1066, %v1185
    %v1194 = vsub.f32 %v1090, %v1185
    %v1195 = vsub.f32 %v1068, %v1186
    %v1196 = vsub.f32 %v1092, %v1186
    %v1197 = vsub.f32 %v1071, %v1187
    %v1198 = vsub.f32 %v1095, %v1187
    %v1199 = vsub.f32 %v1073, %v1188
    %v1200 = vsub.f32 %v1097, %v1188
    %1201 = vst [vmem:[#allocation14] sm:$0xff] %v1189
    %1202 = vst [vmem:[#allocation14 + $0x8] sm:$0xff] %v1190
    %1203 = vst [vmem:[#allocation14 + $0x10] sm:$0xff] %v1191
    %1204 = vst [vmem:[#allocation14 + $0x18] sm:$0xff] %v1192
    %1205 = vst [vmem:[#allocation14 + $0x20] sm:$0xff] %v1193
    %1206 = vst [vmem:[#allocation14 + $0x28] sm:$0xff] %v1194
    %1207 = vst [vmem:[#allocation14 + $0x30] sm:$0xff] %v1195
    %1208 = vst [vmem:[#allocation14 + $0x38] sm:$0xff] %v1196
    %1209 = vst [vmem:[#allocation14 + $0x40] sm:$0xff] %v1197
    %1210 = vst [vmem:[#allocation14 + $0x48] sm:$0xff] %v1198
    %1211 = vst [vmem:[#allocation14 + $0x50] sm:$0xff] %v1199
    %1212 = vst [vmem:[#allocation14 + $0x58] sm:$0xff] %v1200
    // Predicated region
    $region90: #{tpu_custom_call.1} parent=1 // pred_check
      _
    $region91: #{tpu_custom_call.1} parent=1 // pred_check_branch
      %1214 = sbr.rel (0) target = $region93
    $region92: #{tpu_custom_call.1} parent=1 // pred_region
      %1216 = vsyncadd [#allocation5], 0
      %s1217 = sshll.u32 [#allocation14], 4
      %s1218 = int_to_ptr.vmem [resolvable:$true] %s1217
      %s1219 = sshll.u32 %s16, 4
      %s1220 = int_to_ptr.hbm [resolvable:$true] %s1219
      %1225 = dma.vmem_to_hbm [thread:$0]  %s1218, 1536, %s1220, [#allocation5], 256, 256, 16
    $region93: #{tpu_custom_call.1} parent=1 // pred_fallthru
      _
    // Predicated region
    $region94: #{tpu_custom_call.1} parent=1 // pred_check
      _
    $region95: #{tpu_custom_call.1} parent=1 // pred_check_branch
      %1227 = sbr.rel (0) target = $region97
    $region96: #{tpu_custom_call.1} parent=1 // pred_region
      %1229 = dma.done [#allocation5], 1536
    $region97: #{tpu_custom_call.1} parent=1 // pred_fallthru
      _
    %1230 = vsyncpa [#allocation4], 1
    %1231 = vsyncpa [#allocation7], 1
    %1232 = vsyncpa [#allocation10], 1
    %1233 = vsyncpa [#allocation13], 1
    %1234 = vsyncpa [#allocation5], 1

</llo_original>
